<compile_context>
chip_gen: v6e
topology: v6e:2x2x1
jax: 0.10.0
libtpu: 0.0.40
codegen_flags: <defaults>
</compile_context>

<pallas_src>
import functools

import jax
import jax.numpy as jnp
from jax.experimental import pallas as pl
from jax.experimental.pallas import tpu as pltpu


# ----------------------------- Pallas kernel --------------------------------


def _sepconv_kernel(x_ref, dw1_ref, pw1_ref, dw2_ref, pw2_ref, o_ref,
                    xp1_ref, xp2_ref, *,
                    k, stride, padding, H, W, H1, W1, H2, W2, C_in, C_out):
    p = padding
    Hp1, Wp1 = H + 2 * p, W + 2 * p
    Hp2, Wp2 = H1 + 2 * p, W1 + 2 * p

    def zero_border(xp_ref, Hp, Wp, C):
        """Zero only the halo ring; the interior is fully overwritten below."""
        if p == 0:
            return
        z_row = jnp.zeros((C, p, Wp), jnp.float32)
        xp_ref[:, :p, :] = z_row
        xp_ref[:, Hp - p:, :] = z_row
        z_col = jnp.zeros((C, Hp, p), jnp.float32)
        xp_ref[:, :, :p] = z_col
        xp_ref[:, :, Wp - p:] = z_col

    def dw_channel(xp_ref, w_ref, c, H_out, W_out, s):
        """k x k depthwise conv for channel c, read from a padded VMEM plane.

        W sits on the lane axis, so every tap is a lane-dense VPU FMA with a
        scalar (SMEM) weight; the strided output is produced directly.
        """
        acc = None
        base = c * k * k
        for i in range(k):
            for j in range(k):
                w = w_ref[base + i * k + j]            # scalar from SMEM
                if s == 1:
                    tap = xp_ref[c, i:i + H_out, j:j + W_out]
                else:
                    # TODO(synk): stride>1 path (strided ref reads) is untuned
                    # and unexercised by the test configuration.
                    tap = xp_ref[c, pl.ds(i, H_out, s), pl.ds(j, W_out, s)]
                t = tap * w
                acc = t if acc is None else acc + t
        return acc

    # ---- stage 0: halo borders + interior copy into VMEM scratch #1 --------
    zero_border(xp1_ref, Hp1, Wp1, C_in)
    zero_border(xp2_ref, Hp2, Wp2, C_in)
    xp1_ref[:, p:p + H, p:p + W] = x_ref[...].astype(jnp.float32)

    # ---- stage 1: depthwise k x k, stride s ---------------------------------
    y1 = [dw_channel(xp1_ref, dw1_ref, c, H1, W1, stride) for c in range(C_in)]

    # ---- stage 2: pointwise 1x1 + ReLU, written into padded scratch #2 ------
    for co in range(C_in):
        acc = y1[0] * pw1_ref[co * C_in]
        for ci in range(1, C_in):
            acc = acc + y1[ci] * pw1_ref[co * C_in + ci]
        xp2_ref[co, p:p + H1, p:p + W1] = jnp.maximum(acc, 0.0)

    # ---- stage 3: depthwise k x k, stride 1 ---------------------------------
    y2 = [dw_channel(xp2_ref, dw2_ref, c, H2, W2, 1) for c in range(C_in)]

    # ---- stage 4: pointwise 1x1 -> output (NCHW, W on lanes) ----------------
    for co in range(C_out):
        acc = y2[0] * pw2_ref[co * C_in]
        for ci in range(1, C_in):
            acc = acc + y2[ci] * pw2_ref[co * C_in + ci]
        o_ref[co] = acc.astype(o_ref.dtype)


# ------------------------------ wrapper --------------------------------------


def _tile_bytes(shape, itemsize=4):
    """Approx VMEM tile bytes: last dim padded to 128 lanes, 2nd-last to 8 sublanes."""
    lead = 1
    for d in shape[:-2]:
        lead *= d
    sub = -(-shape[-2] // 8) * 8
    lane = -(-shape[-1] // 128) * 128
    return lead * sub * lane * itemsize


def sep_conv(x, params, *, stride, padding):
    """Forward pass of SepConv.  x: (N, C_in, H, W) float32 (NCHW, PyTorch-like)."""
    dw1, pw1, dw2, pw2 = params   # (C_in,k,k), (C_in,C_in), (C_in,k,k), (C_out,C_in)
    N, C_in, H, W = x.shape
    k = dw1.shape[-1]
    C_out = pw2.shape[0]
    p = padding
    H1 = (H + 2 * p - k) // stride + 1
    W1 = (W + 2 * p - k) // stride + 1
    H2 = H1 + 2 * p - k + 1
    W2 = W1 + 2 * p - k + 1
    Hp1, Wp1 = H + 2 * p, W + 2 * p
    Hp2, Wp2 = H1 + 2 * p, W1 + 2 * p

    # All weights are tiny scalar tables -> flat 1-D SMEM arrays (cheap sld reads).
    dw1_flat = dw1.reshape(-1).astype(jnp.float32)
    pw1_flat = pw1.reshape(-1).astype(jnp.float32)
    dw2_flat = dw2.reshape(-1).astype(jnp.float32)
    pw2_flat = pw2.reshape(-1).astype(jnp.float32)

    kern = functools.partial(
        _sepconv_kernel, k=k, stride=stride, padding=p,
        H=H, W=W, H1=H1, W1=W1, H2=H2, W2=W2, C_in=C_in, C_out=C_out)

    # Explicit VMEM budget (double-buffered in/out blocks + both padded planes).
    vmem_need = (2 * _tile_bytes((C_in, H, W)) +
                 2 * _tile_bytes((C_out, H2, W2)) +
                 _tile_bytes((C_in, Hp1, Wp1)) +
                 _tile_bytes((C_in, Hp2, Wp2)))
    vmem_limit = int(min(max(2 * vmem_need, 32 << 20), 48 << 20))

    flops = 2 * N * (k * k * C_in * H1 * W1 + C_in * C_in * H1 * W1 +
                     k * k * C_in * H2 * W2 + C_in * C_out * H2 * W2)
    bytes_accessed = 4 * (x.size + N * C_out * H2 * W2 + dw1_flat.size +
                          pw1_flat.size + dw2_flat.size + pw2_flat.size)

    smem_spec = pl.BlockSpec(memory_space=pltpu.MemorySpace.SMEM)

    return pl.pallas_call(
        kern,
        out_shape=jax.ShapeDtypeStruct((N, C_out, H2, W2), x.dtype),
        grid=(N,),
        in_specs=[
            pl.BlockSpec((pl.Squeezed(), C_in, H, W), lambda n: (n, 0, 0, 0)),
            smem_spec,   # dw1 (flat)
            smem_spec,   # pw1 (flat)
            smem_spec,   # dw2 (flat)
            smem_spec,   # pw2 (flat)
        ],
        out_specs=pl.BlockSpec((pl.Squeezed(), C_out, H2, W2),
                               lambda n: (n, 0, 0, 0)),
        scratch_shapes=[
            pltpu.VMEM((C_in, Hp1, Wp1), jnp.float32),
            pltpu.VMEM((C_in, Hp2, Wp2), jnp.float32),
        ],
        compiler_params=pltpu.CompilerParams(
            dimension_semantics=("parallel",),
            vmem_limit_bytes=vmem_limit),
        cost_estimate=pl.CostEstimate(flops=flops, transcendentals=0,
                                      bytes_accessed=bytes_accessed),
    )(x, dw1_flat, pw1_flat, dw2_flat, pw2_flat)


# ------------------------------ reference -----------------------------------


def sep_conv_ref(x, params, *, stride, padding):
    dw1, pw1, dw2, pw2 = params
    C_in = x.shape[1]
    dn = ("NCHW", "OIHW", "NCHW")

    def dw(x_, w_, s):
        return jax.lax.conv_general_dilated(
            x_, w_[:, None, :, :], window_strides=(s, s),
            padding=[(padding, padding)] * 2,
            dimension_numbers=dn, feature_group_count=C_in)

    def pw(x_, w_):
        return jax.lax.conv_general_dilated(
            x_, w_[:, :, None, None], window_strides=(1, 1),
            padding="VALID", dimension_numbers=dn)

    y = dw(x, dw1, stride)
    y = jnp.maximum(pw(y, pw1), 0.0)
    y = dw(y, dw2, 1)
    return pw(y, pw2)


# -------------------------------- main ---------------------------------------


if __name__ == "__main__":
    N, C_in, C_out, H, W = 2, 4, 8, 16, 16
    k, stride, padding = 3, 1, 1

    key = jax.random.PRNGKey(0)
    kx, k1, k2, k3, k4 = jax.random.split(key, 5)

    x = jax.random.normal(kx, (N, C_in, H, W), jnp.float32)
    # PyTorch weight shapes: (C_in,1,k,k), (C_in,C_in,1,1), (C_in,1,k,k), (C_out,C_in,1,1)
    dw1 = 0.2 * jax.random.normal(k1, (C_in, k, k), jnp.float32)
    pw1 = 0.2 * jax.random.normal(k2, (C_in, C_in), jnp.float32)
    dw2 = 0.2 * jax.random.normal(k3, (C_in, k, k), jnp.float32)
    pw2 = 0.2 * jax.random.normal(k4, (C_out, C_in), jnp.float32)
    params = (dw1, pw1, dw2, pw2)

    out = jax.block_until_ready(sep_conv(x, params, stride=stride, padding=padding))

    ref = sep_conv_ref(x, params, stride=stride, padding=padding)
    assert out.shape == ref.shape, (out.shape, ref.shape)
    max_err = float(jnp.max(jnp.abs(out - ref)))
    assert jnp.allclose(out, ref, rtol=1e-3, atol=1e-3), max_err

    print("KERNEL_OK")
</pallas_src>

<mosaic_0001>
module attributes {stable_mosaic.version = 11 : i64} {
  func.func @_sepconv_kernel(%arg0: i32, %arg1: memref<1x4x16x16xf32, #tpu.memory_space<vmem>>, %arg2: memref<36xf32, #tpu.memory_space<smem>>, %arg3: memref<16xf32, #tpu.memory_space<smem>>, %arg4: memref<36xf32, #tpu.memory_space<smem>>, %arg5: memref<32xf32, #tpu.memory_space<smem>>, %arg6: memref<1x8x16x16xf32, #tpu.memory_space<vmem>>, %arg7: memref<4x18x18xf32, #tpu.memory_space<vmem>>, %arg8: memref<4x18x18xf32, #tpu.memory_space<vmem>>) attributes {dimension_semantics = [#tpu.dimension_semantics<parallel>], iteration_bounds = array<i64: 2>, scalar_prefetch = 0 : i64, scratch_operands = 2 : i64, tpu.core_type = #tpu.core_type<tc>, window_params = [{transform_indices = @transform_0, window_bounds = array<i64: 1, 4, 16, 16>}, {transform_indices = @transform_1, window_bounds = array<i64: 36>}, {transform_indices = @transform_2, window_bounds = array<i64: 16>}, {transform_indices = @transform_3, window_bounds = array<i64: 36>}, {transform_indices = @transform_4, window_bounds = array<i64: 32>}, {transform_indices = @transform_5, window_bounds = array<i64: 1, 8, 16, 16>}]} {
    %cst = arith.constant 0.000000e+00 : f32
    %0 = vector.broadcast %cst : f32 to vector<4x1x18xf32>
    %c0 = arith.constant 0 : index
    %c0_0 = arith.constant 0 : index
    %c0_1 = arith.constant 0 : index
    %1 = vector.load %arg7[%c0, %c0_0, %c0_1] : memref<4x18x18xf32, #tpu.memory_space<vmem>>, vector<4x1x18xf32>
    tpu.vector_store %arg7[%c0, %c0_0, %c0_1], %0 {strides = array<i32>} : memref<4x18x18xf32, #tpu.memory_space<vmem>>, vector<4x1x18xf32>,
    %c0_2 = arith.constant 0 : index
    %c17 = arith.constant 17 : index
    %c0_3 = arith.constant 0 : index
    %2 = vector.load %arg7[%c0_2, %c17, %c0_3] : memref<4x18x18xf32, #tpu.memory_space<vmem>>, vector<4x1x18xf32>
    tpu.vector_store %arg7[%c0_2, %c17, %c0_3], %0 {strides = array<i32>} : memref<4x18x18xf32, #tpu.memory_space<vmem>>, vector<4x1x18xf32>,
    %cst_4 = arith.constant 0.000000e+00 : f32
    %3 = vector.broadcast %cst_4 : f32 to vector<4x18x1xf32>
    %c0_5 = arith.constant 0 : index
    %c0_6 = arith.constant 0 : index
    %c0_7 = arith.constant 0 : index
    %4 = vector.load %arg7[%c0_5, %c0_6, %c0_7] : memref<4x18x18xf32, #tpu.memory_space<vmem>>, vector<4x18x1xf32>
    tpu.vector_store %arg7[%c0_5, %c0_6, %c0_7], %3 {strides = array<i32>} : memref<4x18x18xf32, #tpu.memory_space<vmem>>, vector<4x18x1xf32>,
    %c0_8 = arith.constant 0 : index
    %c0_9 = arith.constant 0 : index
    %c17_10 = arith.constant 17 : index
    %5 = vector.load %arg7[%c0_8, %c0_9, %c17_10] : memref<4x18x18xf32, #tpu.memory_space<vmem>>, vector<4x18x1xf32>
    tpu.vector_store %arg7[%c0_8, %c0_9, %c17_10], %3 {strides = array<i32>} : memref<4x18x18xf32, #tpu.memory_space<vmem>>, vector<4x18x1xf32>,
    %cst_11 = arith.constant 0.000000e+00 : f32
    %6 = vector.broadcast %cst_11 : f32 to vector<4x1x18xf32>
    %c0_12 = arith.constant 0 : index
    %c0_13 = arith.constant 0 : index
    %c0_14 = arith.constant 0 : index
    %7 = vector.load %arg8[%c0_12, %c0_13, %c0_14] : memref<4x18x18xf32, #tpu.memory_space<vmem>>, vector<4x1x18xf32>
    tpu.vector_store %arg8[%c0_12, %c0_13, %c0_14], %6 {strides = array<i32>} : memref<4x18x18xf32, #tpu.memory_space<vmem>>, vector<4x1x18xf32>,
    %c0_15 = arith.constant 0 : index
    %c17_16 = arith.constant 17 : index
    %c0_17 = arith.constant 0 : index
    %8 = vector.load %arg8[%c0_15, %c17_16, %c0_17] : memref<4x18x18xf32, #tpu.memory_space<vmem>>, vector<4x1x18xf32>
    tpu.vector_store %arg8[%c0_15, %c17_16, %c0_17], %6 {strides = array<i32>} : memref<4x18x18xf32, #tpu.memory_space<vmem>>, vector<4x1x18xf32>,
    %cst_18 = arith.constant 0.000000e+00 : f32
    %9 = vector.broadcast %cst_18 : f32 to vector<4x18x1xf32>
    %c0_19 = arith.constant 0 : index
    %c0_20 = arith.constant 0 : index
    %c0_21 = arith.constant 0 : index
    %10 = vector.load %arg8[%c0_19, %c0_20, %c0_21] : memref<4x18x18xf32, #tpu.memory_space<vmem>>, vector<4x18x1xf32>
    tpu.vector_store %arg8[%c0_19, %c0_20, %c0_21], %9 {strides = array<i32>} : memref<4x18x18xf32, #tpu.memory_space<vmem>>, vector<4x18x1xf32>,
    %c0_22 = arith.constant 0 : index
    %c0_23 = arith.constant 0 : index
    %c17_24 = arith.constant 17 : index
    %11 = vector.load %arg8[%c0_22, %c0_23, %c17_24] : memref<4x18x18xf32, #tpu.memory_space<vmem>>, vector<4x18x1xf32>
    tpu.vector_store %arg8[%c0_22, %c0_23, %c17_24], %9 {strides = array<i32>} : memref<4x18x18xf32, #tpu.memory_space<vmem>>, vector<4x18x1xf32>,
    %c0_25 = arith.constant 0 : index
    %c0_26 = arith.constant 0 : index
    %c0_27 = arith.constant 0 : index
    %c0_28 = arith.constant 0 : index
    %12 = vector.load %arg1[%c0_25, %c0_26, %c0_27, %c0_28] : memref<1x4x16x16xf32, #tpu.memory_space<vmem>>, vector<1x4x16x16xf32>
    %13 = vector.shape_cast %12 : vector<1x4x16x16xf32> to vector<4x16x16xf32>
    %c0_29 = arith.constant 0 : index
    %c1 = arith.constant 1 : index
    %c1_30 = arith.constant 1 : index
    %14 = vector.load %arg7[%c0_29, %c1, %c1_30] : memref<4x18x18xf32, #tpu.memory_space<vmem>>, vector<4x16x16xf32>
    tpu.vector_store %arg7[%c0_29, %c1, %c1_30], %13 {strides = array<i32>} : memref<4x18x18xf32, #tpu.memory_space<vmem>>, vector<4x16x16xf32>,
    %c0_31 = arith.constant 0 : index
    %15 = memref.load %arg2[%c0_31] : memref<36xf32, #tpu.memory_space<smem>>
    %c0_32 = arith.constant 0 : index
    %c0_33 = arith.constant 0 : index
    %c0_34 = arith.constant 0 : index
    %16 = vector.load %arg7[%c0_32, %c0_33, %c0_34] : memref<4x18x18xf32, #tpu.memory_space<vmem>>, vector<1x16x16xf32>
    %17 = vector.shape_cast %16 : vector<1x16x16xf32> to vector<16x16xf32>
    %18 = vector.broadcast %15 : f32 to vector<16x16xf32>
    %19 = arith.mulf %17, %18 : vector<16x16xf32>
    %c1_35 = arith.constant 1 : index
    %20 = memref.load %arg2[%c1_35] : memref<36xf32, #tpu.memory_space<smem>>
    %c0_36 = arith.constant 0 : index
    %c0_37 = arith.constant 0 : index
    %c1_38 = arith.constant 1 : index
    %21 = vector.load %arg7[%c0_36, %c0_37, %c1_38] : memref<4x18x18xf32, #tpu.memory_space<vmem>>, vector<1x16x16xf32>
    %22 = vector.shape_cast %21 : vector<1x16x16xf32> to vector<16x16xf32>
    %23 = vector.broadcast %20 : f32 to vector<16x16xf32>
    %24 = arith.mulf %22, %23 : vector<16x16xf32>
    %25 = arith.addf %19, %24 : vector<16x16xf32>
    %c2 = arith.constant 2 : index
    %26 = memref.load %arg2[%c2] : memref<36xf32, #tpu.memory_space<smem>>
    %c0_39 = arith.constant 0 : index
    %c0_40 = arith.constant 0 : index
    %c2_41 = arith.constant 2 : index
    %27 = vector.load %arg7[%c0_39, %c0_40, %c2_41] : memref<4x18x18xf32, #tpu.memory_space<vmem>>, vector<1x16x16xf32>
    %28 = vector.shape_cast %27 : vector<1x16x16xf32> to vector<16x16xf32>
    %29 = vector.broadcast %26 : f32 to vector<16x16xf32>
    %30 = arith.mulf %28, %29 : vector<16x16xf32>
    %31 = arith.addf %25, %30 : vector<16x16xf32>
    %c3 = arith.constant 3 : index
    %32 = memref.load %arg2[%c3] : memref<36xf32, #tpu.memory_space<smem>>
    %c0_42 = arith.constant 0 : index
    %c1_43 = arith.constant 1 : index
    %c0_44 = arith.constant 0 : index
    %33 = vector.load %arg7[%c0_42, %c1_43, %c0_44] : memref<4x18x18xf32, #tpu.memory_space<vmem>>, vector<1x16x16xf32>
    %34 = vector.shape_cast %33 : vector<1x16x16xf32> to vector<16x16xf32>
    %35 = vector.broadcast %32 : f32 to vector<16x16xf32>
    %36 = arith.mulf %34, %35 : vector<16x16xf32>
    %37 = arith.addf %31, %36 : vector<16x16xf32>
    %c4 = arith.constant 4 : index
    %38 = memref.load %arg2[%c4] : memref<36xf32, #tpu.memory_space<smem>>
    %c0_45 = arith.constant 0 : index
    %c1_46 = arith.constant 1 : index
    %c1_47 = arith.constant 1 : index
    %39 = vector.load %arg7[%c0_45, %c1_46, %c1_47] : memref<4x18x18xf32, #tpu.memory_space<vmem>>, vector<1x16x16xf32>
    %40 = vector.shape_cast %39 : vector<1x16x16xf32> to vector<16x16xf32>
    %41 = vector.broadcast %38 : f32 to vector<16x16xf32>
    %42 = arith.mulf %40, %41 : vector<16x16xf32>
    %43 = arith.addf %37, %42 : vector<16x16xf32>
    %c5 = arith.constant 5 : index
    %44 = memref.load %arg2[%c5] : memref<36xf32, #tpu.memory_space<smem>>
    %c0_48 = arith.constant 0 : index
    %c1_49 = arith.constant 1 : index
    %c2_50 = arith.constant 2 : index
    %45 = vector.load %arg7[%c0_48, %c1_49, %c2_50] : memref<4x18x18xf32, #tpu.memory_space<vmem>>, vector<1x16x16xf32>
    %46 = vector.shape_cast %45 : vector<1x16x16xf32> to vector<16x16xf32>
    %47 = vector.broadcast %44 : f32 to vector<16x16xf32>
    %48 = arith.mulf %46, %47 : vector<16x16xf32>
    %49 = arith.addf %43, %48 : vector<16x16xf32>
    %c6 = arith.constant 6 : index
    %50 = memref.load %arg2[%c6] : memref<36xf32, #tpu.memory_space<smem>>
    %c0_51 = arith.constant 0 : index
    %c2_52 = arith.constant 2 : index
    %c0_53 = arith.constant 0 : index
    %51 = vector.load %arg7[%c0_51, %c2_52, %c0_53] : memref<4x18x18xf32, #tpu.memory_space<vmem>>, vector<1x16x16xf32>
    %52 = vector.shape_cast %51 : vector<1x16x16xf32> to vector<16x16xf32>
    %53 = vector.broadcast %50 : f32 to vector<16x16xf32>
    %54 = arith.mulf %52, %53 : vector<16x16xf32>
    %55 = arith.addf %49, %54 : vector<16x16xf32>
    %c7 = arith.constant 7 : index
    %56 = memref.load %arg2[%c7] : memref<36xf32, #tpu.memory_space<smem>>
    %c0_54 = arith.constant 0 : index
    %c2_55 = arith.constant 2 : index
    %c1_56 = arith.constant 1 : index
    %57 = vector.load %arg7[%c0_54, %c2_55, %c1_56] : memref<4x18x18xf32, #tpu.memory_space<vmem>>, vector<1x16x16xf32>
    %58 = vector.shape_cast %57 : vector<1x16x16xf32> to vector<16x16xf32>
    %59 = vector.broadcast %56 : f32 to vector<16x16xf32>
    %60 = arith.mulf %58, %59 : vector<16x16xf32>
    %61 = arith.addf %55, %60 : vector<16x16xf32>
    %c8 = arith.constant 8 : index
    %62 = memref.load %arg2[%c8] : memref<36xf32, #tpu.memory_space<smem>>
    %c0_57 = arith.constant 0 : index
    %c2_58 = arith.constant 2 : index
    %c2_59 = arith.constant 2 : index
    %63 = vector.load %arg7[%c0_57, %c2_58, %c2_59] : memref<4x18x18xf32, #tpu.memory_space<vmem>>, vector<1x16x16xf32>
    %64 = vector.shape_cast %63 : vector<1x16x16xf32> to vector<16x16xf32>
    %65 = vector.broadcast %62 : f32 to vector<16x16xf32>
    %66 = arith.mulf %64, %65 : vector<16x16xf32>
    %67 = arith.addf %61, %66 : vector<16x16xf32>
    %c9 = arith.constant 9 : index
    %68 = memref.load %arg2[%c9] : memref<36xf32, #tpu.memory_space<smem>>
    %c1_60 = arith.constant 1 : index
    %c0_61 = arith.constant 0 : index
    %c0_62 = arith.constant 0 : index
    %69 = vector.load %arg7[%c1_60, %c0_61, %c0_62] : memref<4x18x18xf32, #tpu.memory_space<vmem>>, vector<1x16x16xf32>
    %70 = vector.shape_cast %69 : vector<1x16x16xf32> to vector<16x16xf32>
    %71 = vector.broadcast %68 : f32 to vector<16x16xf32>
    %72 = arith.mulf %70, %71 : vector<16x16xf32>
    %c10 = arith.constant 10 : index
    %73 = memref.load %arg2[%c10] : memref<36xf32, #tpu.memory_space<smem>>
    %c1_63 = arith.constant 1 : index
    %c0_64 = arith.constant 0 : index
    %c1_65 = arith.constant 1 : index
    %74 = vector.load %arg7[%c1_63, %c0_64, %c1_65] : memref<4x18x18xf32, #tpu.memory_space<vmem>>, vector<1x16x16xf32>
    %75 = vector.shape_cast %74 : vector<1x16x16xf32> to vector<16x16xf32>
    %76 = vector.broadcast %73 : f32 to vector<16x16xf32>
    %77 = arith.mulf %75, %76 : vector<16x16xf32>
    %78 = arith.addf %72, %77 : vector<16x16xf32>
    %c11 = arith.constant 11 : index
    %79 = memref.load %arg2[%c11] : memref<36xf32, #tpu.memory_space<smem>>
    %c1_66 = arith.constant 1 : index
    %c0_67 = arith.constant 0 : index
    %c2_68 = arith.constant 2 : index
    %80 = vector.load %arg7[%c1_66, %c0_67, %c2_68] : memref<4x18x18xf32, #tpu.memory_space<vmem>>, vector<1x16x16xf32>
    %81 = vector.shape_cast %80 : vector<1x16x16xf32> to vector<16x16xf32>
    %82 = vector.broadcast %79 : f32 to vector<16x16xf32>
    %83 = arith.mulf %81, %82 : vector<16x16xf32>
    %84 = arith.addf %78, %83 : vector<16x16xf32>
    %c12 = arith.constant 12 : index
    %85 = memref.load %arg2[%c12] : memref<36xf32, #tpu.memory_space<smem>>
    %c1_69 = arith.constant 1 : index
    %c1_70 = arith.constant 1 : index
    %c0_71 = arith.constant 0 : index
    %86 = vector.load %arg7[%c1_69, %c1_70, %c0_71] : memref<4x18x18xf32, #tpu.memory_space<vmem>>, vector<1x16x16xf32>
    %87 = vector.shape_cast %86 : vector<1x16x16xf32> to vector<16x16xf32>
    %88 = vector.broadcast %85 : f32 to vector<16x16xf32>
    %89 = arith.mulf %87, %88 : vector<16x16xf32>
    %90 = arith.addf %84, %89 : vector<16x16xf32>
    %c13 = arith.constant 13 : index
    %91 = memref.load %arg2[%c13] : memref<36xf32, #tpu.memory_space<smem>>
    %c1_72 = arith.constant 1 : index
    %c1_73 = arith.constant 1 : index
    %c1_74 = arith.constant 1 : index
    %92 = vector.load %arg7[%c1_72, %c1_73, %c1_74] : memref<4x18x18xf32, #tpu.memory_space<vmem>>, vector<1x16x16xf32>
    %93 = vector.shape_cast %92 : vector<1x16x16xf32> to vector<16x16xf32>
    %94 = vector.broadcast %91 : f32 to vector<16x16xf32>
    %95 = arith.mulf %93, %94 : vector<16x16xf32>
    %96 = arith.addf %90, %95 : vector<16x16xf32>
    %c14 = arith.constant 14 : index
    %97 = memref.load %arg2[%c14] : memref<36xf32, #tpu.memory_space<smem>>
    %c1_75 = arith.constant 1 : index
    %c1_76 = arith.constant 1 : index
    %c2_77 = arith.constant 2 : index
    %98 = vector.load %arg7[%c1_75, %c1_76, %c2_77] : memref<4x18x18xf32, #tpu.memory_space<vmem>>, vector<1x16x16xf32>
    %99 = vector.shape_cast %98 : vector<1x16x16xf32> to vector<16x16xf32>
    %100 = vector.broadcast %97 : f32 to vector<16x16xf32>
    %101 = arith.mulf %99, %100 : vector<16x16xf32>
    %102 = arith.addf %96, %101 : vector<16x16xf32>
    %c15 = arith.constant 15 : index
    %103 = memref.load %arg2[%c15] : memref<36xf32, #tpu.memory_space<smem>>
    %c1_78 = arith.constant 1 : index
    %c2_79 = arith.constant 2 : index
    %c0_80 = arith.constant 0 : index
    %104 = vector.load %arg7[%c1_78, %c2_79, %c0_80] : memref<4x18x18xf32, #tpu.memory_space<vmem>>, vector<1x16x16xf32>
    %105 = vector.shape_cast %104 : vector<1x16x16xf32> to vector<16x16xf32>
    %106 = vector.broadcast %103 : f32 to vector<16x16xf32>
    %107 = arith.mulf %105, %106 : vector<16x16xf32>
    %108 = arith.addf %102, %107 : vector<16x16xf32>
    %c16 = arith.constant 16 : index
    %109 = memref.load %arg2[%c16] : memref<36xf32, #tpu.memory_space<smem>>
    %c1_81 = arith.constant 1 : index
    %c2_82 = arith.constant 2 : index
    %c1_83 = arith.constant 1 : index
    %110 = vector.load %arg7[%c1_81, %c2_82, %c1_83] : memref<4x18x18xf32, #tpu.memory_space<vmem>>, vector<1x16x16xf32>
    %111 = vector.shape_cast %110 : vector<1x16x16xf32> to vector<16x16xf32>
    %112 = vector.broadcast %109 : f32 to vector<16x16xf32>
    %113 = arith.mulf %111, %112 : vector<16x16xf32>
    %114 = arith.addf %108, %113 : vector<16x16xf32>
    %c17_84 = arith.constant 17 : index
    %115 = memref.load %arg2[%c17_84] : memref<36xf32, #tpu.memory_space<smem>>
    %c1_85 = arith.constant 1 : index
    %c2_86 = arith.constant 2 : index
    %c2_87 = arith.constant 2 : index
    %116 = vector.load %arg7[%c1_85, %c2_86, %c2_87] : memref<4x18x18xf32, #tpu.memory_space<vmem>>, vector<1x16x16xf32>
    %117 = vector.shape_cast %116 : vector<1x16x16xf32> to vector<16x16xf32>
    %118 = vector.broadcast %115 : f32 to vector<16x16xf32>
    %119 = arith.mulf %117, %118 : vector<16x16xf32>
    %120 = arith.addf %114, %119 : vector<16x16xf32>
    %c18 = arith.constant 18 : index
    %121 = memref.load %arg2[%c18] : memref<36xf32, #tpu.memory_space<smem>>
    %c2_88 = arith.constant 2 : index
    %c0_89 = arith.constant 0 : index
    %c0_90 = arith.constant 0 : index
    %122 = vector.load %arg7[%c2_88, %c0_89, %c0_90] : memref<4x18x18xf32, #tpu.memory_space<vmem>>, vector<1x16x16xf32>
    %123 = vector.shape_cast %122 : vector<1x16x16xf32> to vector<16x16xf32>
    %124 = vector.broadcast %121 : f32 to vector<16x16xf32>
    %125 = arith.mulf %123, %124 : vector<16x16xf32>
    %c19 = arith.constant 19 : index
    %126 = memref.load %arg2[%c19] : memref<36xf32, #tpu.memory_space<smem>>
    %c2_91 = arith.constant 2 : index
    %c0_92 = arith.constant 0 : index
    %c1_93 = arith.constant 1 : index
    %127 = vector.load %arg7[%c2_91, %c0_92, %c1_93] : memref<4x18x18xf32, #tpu.memory_space<vmem>>, vector<1x16x16xf32>
    %128 = vector.shape_cast %127 : vector<1x16x16xf32> to vector<16x16xf32>
    %129 = vector.broadcast %126 : f32 to vector<16x16xf32>
    %130 = arith.mulf %128, %129 : vector<16x16xf32>
    %131 = arith.addf %125, %130 : vector<16x16xf32>
    %c20 = arith.constant 20 : index
    %132 = memref.load %arg2[%c20] : memref<36xf32, #tpu.memory_space<smem>>
    %c2_94 = arith.constant 2 : index
    %c0_95 = arith.constant 0 : index
    %c2_96 = arith.constant 2 : index
    %133 = vector.load %arg7[%c2_94, %c0_95, %c2_96] : memref<4x18x18xf32, #tpu.memory_space<vmem>>, vector<1x16x16xf32>
    %134 = vector.shape_cast %133 : vector<1x16x16xf32> to vector<16x16xf32>
    %135 = vector.broadcast %132 : f32 to vector<16x16xf32>
    %136 = arith.mulf %134, %135 : vector<16x16xf32>
    %137 = arith.addf %131, %136 : vector<16x16xf32>
    %c21 = arith.constant 21 : index
    %138 = memref.load %arg2[%c21] : memref<36xf32, #tpu.memory_space<smem>>
    %c2_97 = arith.constant 2 : index
    %c1_98 = arith.constant 1 : index
    %c0_99 = arith.constant 0 : index
    %139 = vector.load %arg7[%c2_97, %c1_98, %c0_99] : memref<4x18x18xf32, #tpu.memory_space<vmem>>, vector<1x16x16xf32>
    %140 = vector.shape_cast %139 : vector<1x16x16xf32> to vector<16x16xf32>
    %141 = vector.broadcast %138 : f32 to vector<16x16xf32>
    %142 = arith.mulf %140, %141 : vector<16x16xf32>
    %143 = arith.addf %137, %142 : vector<16x16xf32>
    %c22 = arith.constant 22 : index
    %144 = memref.load %arg2[%c22] : memref<36xf32, #tpu.memory_space<smem>>
    %c2_100 = arith.constant 2 : index
    %c1_101 = arith.constant 1 : index
    %c1_102 = arith.constant 1 : index
    %145 = vector.load %arg7[%c2_100, %c1_101, %c1_102] : memref<4x18x18xf32, #tpu.memory_space<vmem>>, vector<1x16x16xf32>
    %146 = vector.shape_cast %145 : vector<1x16x16xf32> to vector<16x16xf32>
    %147 = vector.broadcast %144 : f32 to vector<16x16xf32>
    %148 = arith.mulf %146, %147 : vector<16x16xf32>
    %149 = arith.addf %143, %148 : vector<16x16xf32>
    %c23 = arith.constant 23 : index
    %150 = memref.load %arg2[%c23] : memref<36xf32, #tpu.memory_space<smem>>
    %c2_103 = arith.constant 2 : index
    %c1_104 = arith.constant 1 : index
    %c2_105 = arith.constant 2 : index
    %151 = vector.load %arg7[%c2_103, %c1_104, %c2_105] : memref<4x18x18xf32, #tpu.memory_space<vmem>>, vector<1x16x16xf32>
    %152 = vector.shape_cast %151 : vector<1x16x16xf32> to vector<16x16xf32>
    %153 = vector.broadcast %150 : f32 to vector<16x16xf32>
    %154 = arith.mulf %152, %153 : vector<16x16xf32>
    %155 = arith.addf %149, %154 : vector<16x16xf32>
    %c24 = arith.constant 24 : index
    %156 = memref.load %arg2[%c24] : memref<36xf32, #tpu.memory_space<smem>>
    %c2_106 = arith.constant 2 : index
    %c2_107 = arith.constant 2 : index
    %c0_108 = arith.constant 0 : index
    %157 = vector.load %arg7[%c2_106, %c2_107, %c0_108] : memref<4x18x18xf32, #tpu.memory_space<vmem>>, vector<1x16x16xf32>
    %158 = vector.shape_cast %157 : vector<1x16x16xf32> to vector<16x16xf32>
    %159 = vector.broadcast %156 : f32 to vector<16x16xf32>
    %160 = arith.mulf %158, %159 : vector<16x16xf32>
    %161 = arith.addf %155, %160 : vector<16x16xf32>
    %c25 = arith.constant 25 : index
    %162 = memref.load %arg2[%c25] : memref<36xf32, #tpu.memory_space<smem>>
    %c2_109 = arith.constant 2 : index
    %c2_110 = arith.constant 2 : index
    %c1_111 = arith.constant 1 : index
    %163 = vector.load %arg7[%c2_109, %c2_110, %c1_111] : memref<4x18x18xf32, #tpu.memory_space<vmem>>, vector<1x16x16xf32>
    %164 = vector.shape_cast %163 : vector<1x16x16xf32> to vector<16x16xf32>
    %165 = vector.broadcast %162 : f32 to vector<16x16xf32>
    %166 = arith.mulf %164, %165 : vector<16x16xf32>
    %167 = arith.addf %161, %166 : vector<16x16xf32>
    %c26 = arith.constant 26 : index
    %168 = memref.load %arg2[%c26] : memref<36xf32, #tpu.memory_space<smem>>
    %c2_112 = arith.constant 2 : index
    %c2_113 = arith.constant 2 : index
    %c2_114 = arith.constant 2 : index
    %169 = vector.load %arg7[%c2_112, %c2_113, %c2_114] : memref<4x18x18xf32, #tpu.memory_space<vmem>>, vector<1x16x16xf32>
    %170 = vector.shape_cast %169 : vector<1x16x16xf32> to vector<16x16xf32>
    %171 = vector.broadcast %168 : f32 to vector<16x16xf32>
    %172 = arith.mulf %170, %171 : vector<16x16xf32>
    %173 = arith.addf %167, %172 : vector<16x16xf32>
    %c27 = arith.constant 27 : index
    %174 = memref.load %arg2[%c27] : memref<36xf32, #tpu.memory_space<smem>>
    %c3_115 = arith.constant 3 : index
    %c0_116 = arith.constant 0 : index
    %c0_117 = arith.constant 0 : index
    %175 = vector.load %arg7[%c3_115, %c0_116, %c0_117] : memref<4x18x18xf32, #tpu.memory_space<vmem>>, vector<1x16x16xf32>
    %176 = vector.shape_cast %175 : vector<1x16x16xf32> to vector<16x16xf32>
    %177 = vector.broadcast %174 : f32 to vector<16x16xf32>
    %178 = arith.mulf %176, %177 : vector<16x16xf32>
    %c28 = arith.constant 28 : index
    %179 = memref.load %arg2[%c28] : memref<36xf32, #tpu.memory_space<smem>>
    %c3_118 = arith.constant 3 : index
    %c0_119 = arith.constant 0 : index
    %c1_120 = arith.constant 1 : index
    %180 = vector.load %arg7[%c3_118, %c0_119, %c1_120] : memref<4x18x18xf32, #tpu.memory_space<vmem>>, vector<1x16x16xf32>
    %181 = vector.shape_cast %180 : vector<1x16x16xf32> to vector<16x16xf32>
    %182 = vector.broadcast %179 : f32 to vector<16x16xf32>
    %183 = arith.mulf %181, %182 : vector<16x16xf32>
    %184 = arith.addf %178, %183 : vector<16x16xf32>
    %c29 = arith.constant 29 : index
    %185 = memref.load %arg2[%c29] : memref<36xf32, #tpu.memory_space<smem>>
    %c3_121 = arith.constant 3 : index
    %c0_122 = arith.constant 0 : index
    %c2_123 = arith.constant 2 : index
    %186 = vector.load %arg7[%c3_121, %c0_122, %c2_123] : memref<4x18x18xf32, #tpu.memory_space<vmem>>, vector<1x16x16xf32>
    %187 = vector.shape_cast %186 : vector<1x16x16xf32> to vector<16x16xf32>
    %188 = vector.broadcast %185 : f32 to vector<16x16xf32>
    %189 = arith.mulf %187, %188 : vector<16x16xf32>
    %190 = arith.addf %184, %189 : vector<16x16xf32>
    %c30 = arith.constant 30 : index
    %191 = memref.load %arg2[%c30] : memref<36xf32, #tpu.memory_space<smem>>
    %c3_124 = arith.constant 3 : index
    %c1_125 = arith.constant 1 : index
    %c0_126 = arith.constant 0 : index
    %192 = vector.load %arg7[%c3_124, %c1_125, %c0_126] : memref<4x18x18xf32, #tpu.memory_space<vmem>>, vector<1x16x16xf32>
    %193 = vector.shape_cast %192 : vector<1x16x16xf32> to vector<16x16xf32>
    %194 = vector.broadcast %191 : f32 to vector<16x16xf32>
    %195 = arith.mulf %193, %194 : vector<16x16xf32>
    %196 = arith.addf %190, %195 : vector<16x16xf32>
    %c31 = arith.constant 31 : index
    %197 = memref.load %arg2[%c31] : memref<36xf32, #tpu.memory_space<smem>>
    %c3_127 = arith.constant 3 : index
    %c1_128 = arith.constant 1 : index
    %c1_129 = arith.constant 1 : index
    %198 = vector.load %arg7[%c3_127, %c1_128, %c1_129] : memref<4x18x18xf32, #tpu.memory_space<vmem>>, vector<1x16x16xf32>
    %199 = vector.shape_cast %198 : vector<1x16x16xf32> to vector<16x16xf32>
    %200 = vector.broadcast %197 : f32 to vector<16x16xf32>
    %201 = arith.mulf %199, %200 : vector<16x16xf32>
    %202 = arith.addf %196, %201 : vector<16x16xf32>
    %c32 = arith.constant 32 : index
    %203 = memref.load %arg2[%c32] : memref<36xf32, #tpu.memory_space<smem>>
    %c3_130 = arith.constant 3 : index
    %c1_131 = arith.constant 1 : index
    %c2_132 = arith.constant 2 : index
    %204 = vector.load %arg7[%c3_130, %c1_131, %c2_132] : memref<4x18x18xf32, #tpu.memory_space<vmem>>, vector<1x16x16xf32>
    %205 = vector.shape_cast %204 : vector<1x16x16xf32> to vector<16x16xf32>
    %206 = vector.broadcast %203 : f32 to vector<16x16xf32>
    %207 = arith.mulf %205, %206 : vector<16x16xf32>
    %208 = arith.addf %202, %207 : vector<16x16xf32>
    %c33 = arith.constant 33 : index
    %209 = memref.load %arg2[%c33] : memref<36xf32, #tpu.memory_space<smem>>
    %c3_133 = arith.constant 3 : index
    %c2_134 = arith.constant 2 : index
    %c0_135 = arith.constant 0 : index
    %210 = vector.load %arg7[%c3_133, %c2_134, %c0_135] : memref<4x18x18xf32, #tpu.memory_space<vmem>>, vector<1x16x16xf32>
    %211 = vector.shape_cast %210 : vector<1x16x16xf32> to vector<16x16xf32>
    %212 = vector.broadcast %209 : f32 to vector<16x16xf32>
    %213 = arith.mulf %211, %212 : vector<16x16xf32>
    %214 = arith.addf %208, %213 : vector<16x16xf32>
    %c34 = arith.constant 34 : index
    %215 = memref.load %arg2[%c34] : memref<36xf32, #tpu.memory_space<smem>>
    %c3_136 = arith.constant 3 : index
    %c2_137 = arith.constant 2 : index
    %c1_138 = arith.constant 1 : index
    %216 = vector.load %arg7[%c3_136, %c2_137, %c1_138] : memref<4x18x18xf32, #tpu.memory_space<vmem>>, vector<1x16x16xf32>
    %217 = vector.shape_cast %216 : vector<1x16x16xf32> to vector<16x16xf32>
    %218 = vector.broadcast %215 : f32 to vector<16x16xf32>
    %219 = arith.mulf %217, %218 : vector<16x16xf32>
    %220 = arith.addf %214, %219 : vector<16x16xf32>
    %c35 = arith.constant 35 : index
    %221 = memref.load %arg2[%c35] : memref<36xf32, #tpu.memory_space<smem>>
    %c3_139 = arith.constant 3 : index
    %c2_140 = arith.constant 2 : index
    %c2_141 = arith.constant 2 : index
    %222 = vector.load %arg7[%c3_139, %c2_140, %c2_141] : memref<4x18x18xf32, #tpu.memory_space<vmem>>, vector<1x16x16xf32>
    %223 = vector.shape_cast %222 : vector<1x16x16xf32> to vector<16x16xf32>
    %224 = vector.broadcast %221 : f32 to vector<16x16xf32>
    %225 = arith.mulf %223, %224 : vector<16x16xf32>
    %226 = arith.addf %220, %225 : vector<16x16xf32>
    %c0_142 = arith.constant 0 : index
    %227 = memref.load %arg3[%c0_142] : memref<16xf32, #tpu.memory_space<smem>>
    %228 = vector.broadcast %227 : f32 to vector<16x16xf32>
    %229 = arith.mulf %67, %228 : vector<16x16xf32>
    %c1_143 = arith.constant 1 : index
    %230 = memref.load %arg3[%c1_143] : memref<16xf32, #tpu.memory_space<smem>>
    %231 = vector.broadcast %230 : f32 to vector<16x16xf32>
    %232 = arith.mulf %120, %231 : vector<16x16xf32>
    %233 = arith.addf %229, %232 : vector<16x16xf32>
    %c2_144 = arith.constant 2 : index
    %234 = memref.load %arg3[%c2_144] : memref<16xf32, #tpu.memory_space<smem>>
    %235 = vector.broadcast %234 : f32 to vector<16x16xf32>
    %236 = arith.mulf %173, %235 : vector<16x16xf32>
    %237 = arith.addf %233, %236 : vector<16x16xf32>
    %c3_145 = arith.constant 3 : index
    %238 = memref.load %arg3[%c3_145] : memref<16xf32, #tpu.memory_space<smem>>
    %239 = vector.broadcast %238 : f32 to vector<16x16xf32>
    %240 = arith.mulf %226, %239 : vector<16x16xf32>
    %241 = arith.addf %237, %240 : vector<16x16xf32>
    %cst_146 = arith.constant 0.000000e+00 : f32
    %242 = vector.broadcast %cst_146 : f32 to vector<16x16xf32>
    %243 = arith.maximumf %241, %242 : vector<16x16xf32>
    %c0_147 = arith.constant 0 : index
    %c1_148 = arith.constant 1 : index
    %c1_149 = arith.constant 1 : index
    %244 = vector.load %arg8[%c0_147, %c1_148, %c1_149] : memref<4x18x18xf32, #tpu.memory_space<vmem>>, vector<1x16x16xf32>
    %245 = vector.shape_cast %244 : vector<1x16x16xf32> to vector<16x16xf32>
    %246 = vector.shape_cast %243 : vector<16x16xf32> to vector<1x16x16xf32>
    tpu.vector_store %arg8[%c0_147, %c1_148, %c1_149], %246 {strides = array<i32>} : memref<4x18x18xf32, #tpu.memory_space<vmem>>, vector<1x16x16xf32>,
    %c4_150 = arith.constant 4 : index
    %247 = memref.load %arg3[%c4_150] : memref<16xf32, #tpu.memory_space<smem>>
    %248 = vector.broadcast %247 : f32 to vector<16x16xf32>
    %249 = arith.mulf %67, %248 : vector<16x16xf32>
    %c5_151 = arith.constant 5 : index
    %250 = memref.load %arg3[%c5_151] : memref<16xf32, #tpu.memory_space<smem>>
    %251 = vector.broadcast %250 : f32 to vector<16x16xf32>
    %252 = arith.mulf %120, %251 : vector<16x16xf32>
    %253 = arith.addf %249, %252 : vector<16x16xf32>
    %c6_152 = arith.constant 6 : index
    %254 = memref.load %arg3[%c6_152] : memref<16xf32, #tpu.memory_space<smem>>
    %255 = vector.broadcast %254 : f32 to vector<16x16xf32>
    %256 = arith.mulf %173, %255 : vector<16x16xf32>
    %257 = arith.addf %253, %256 : vector<16x16xf32>
    %c7_153 = arith.constant 7 : index
    %258 = memref.load %arg3[%c7_153] : memref<16xf32, #tpu.memory_space<smem>>
    %259 = vector.broadcast %258 : f32 to vector<16x16xf32>
    %260 = arith.mulf %226, %259 : vector<16x16xf32>
    %261 = arith.addf %257, %260 : vector<16x16xf32>
    %cst_154 = arith.constant 0.000000e+00 : f32
    %262 = vector.broadcast %cst_154 : f32 to vector<16x16xf32>
    %263 = arith.maximumf %261, %262 : vector<16x16xf32>
    %c1_155 = arith.constant 1 : index
    %c1_156 = arith.constant 1 : index
    %c1_157 = arith.constant 1 : index
    %264 = vector.load %arg8[%c1_155, %c1_156, %c1_157] : memref<4x18x18xf32, #tpu.memory_space<vmem>>, vector<1x16x16xf32>
    %265 = vector.shape_cast %264 : vector<1x16x16xf32> to vector<16x16xf32>
    %266 = vector.shape_cast %263 : vector<16x16xf32> to vector<1x16x16xf32>
    tpu.vector_store %arg8[%c1_155, %c1_156, %c1_157], %266 {strides = array<i32>} : memref<4x18x18xf32, #tpu.memory_space<vmem>>, vector<1x16x16xf32>,
    %c8_158 = arith.constant 8 : index
    %267 = memref.load %arg3[%c8_158] : memref<16xf32, #tpu.memory_space<smem>>
    %268 = vector.broadcast %267 : f32 to vector<16x16xf32>
    %269 = arith.mulf %67, %268 : vector<16x16xf32>
    %c9_159 = arith.constant 9 : index
    %270 = memref.load %arg3[%c9_159] : memref<16xf32, #tpu.memory_space<smem>>
    %271 = vector.broadcast %270 : f32 to vector<16x16xf32>
    %272 = arith.mulf %120, %271 : vector<16x16xf32>
    %273 = arith.addf %269, %272 : vector<16x16xf32>
    %c10_160 = arith.constant 10 : index
    %274 = memref.load %arg3[%c10_160] : memref<16xf32, #tpu.memory_space<smem>>
    %275 = vector.broadcast %274 : f32 to vector<16x16xf32>
    %276 = arith.mulf %173, %275 : vector<16x16xf32>
    %277 = arith.addf %273, %276 : vector<16x16xf32>
    %c11_161 = arith.constant 11 : index
    %278 = memref.load %arg3[%c11_161] : memref<16xf32, #tpu.memory_space<smem>>
    %279 = vector.broadcast %278 : f32 to vector<16x16xf32>
    %280 = arith.mulf %226, %279 : vector<16x16xf32>
    %281 = arith.addf %277, %280 : vector<16x16xf32>
    %cst_162 = arith.constant 0.000000e+00 : f32
    %282 = vector.broadcast %cst_162 : f32 to vector<16x16xf32>
    %283 = arith.maximumf %281, %282 : vector<16x16xf32>
    %c2_163 = arith.constant 2 : index
    %c1_164 = arith.constant 1 : index
    %c1_165 = arith.constant 1 : index
    %284 = vector.load %arg8[%c2_163, %c1_164, %c1_165] : memref<4x18x18xf32, #tpu.memory_space<vmem>>, vector<1x16x16xf32>
    %285 = vector.shape_cast %284 : vector<1x16x16xf32> to vector<16x16xf32>
    %286 = vector.shape_cast %283 : vector<16x16xf32> to vector<1x16x16xf32>
    tpu.vector_store %arg8[%c2_163, %c1_164, %c1_165], %286 {strides = array<i32>} : memref<4x18x18xf32, #tpu.memory_space<vmem>>, vector<1x16x16xf32>,
    %c12_166 = arith.constant 12 : index
    %287 = memref.load %arg3[%c12_166] : memref<16xf32, #tpu.memory_space<smem>>
    %288 = vector.broadcast %287 : f32 to vector<16x16xf32>
    %289 = arith.mulf %67, %288 : vector<16x16xf32>
    %c13_167 = arith.constant 13 : index
    %290 = memref.load %arg3[%c13_167] : memref<16xf32, #tpu.memory_space<smem>>
    %291 = vector.broadcast %290 : f32 to vector<16x16xf32>
    %292 = arith.mulf %120, %291 : vector<16x16xf32>
    %293 = arith.addf %289, %292 : vector<16x16xf32>
    %c14_168 = arith.constant 14 : index
    %294 = memref.load %arg3[%c14_168] : memref<16xf32, #tpu.memory_space<smem>>
    %295 = vector.broadcast %294 : f32 to vector<16x16xf32>
    %296 = arith.mulf %173, %295 : vector<16x16xf32>
    %297 = arith.addf %293, %296 : vector<16x16xf32>
    %c15_169 = arith.constant 15 : index
    %298 = memref.load %arg3[%c15_169] : memref<16xf32, #tpu.memory_space<smem>>
    %299 = vector.broadcast %298 : f32 to vector<16x16xf32>
    %300 = arith.mulf %226, %299 : vector<16x16xf32>
    %301 = arith.addf %297, %300 : vector<16x16xf32>
    %cst_170 = arith.constant 0.000000e+00 : f32
    %302 = vector.broadcast %cst_170 : f32 to vector<16x16xf32>
    %303 = arith.maximumf %301, %302 : vector<16x16xf32>
    %c3_171 = arith.constant 3 : index
    %c1_172 = arith.constant 1 : index
    %c1_173 = arith.constant 1 : index
    %304 = vector.load %arg8[%c3_171, %c1_172, %c1_173] : memref<4x18x18xf32, #tpu.memory_space<vmem>>, vector<1x16x16xf32>
    %305 = vector.shape_cast %304 : vector<1x16x16xf32> to vector<16x16xf32>
    %306 = vector.shape_cast %303 : vector<16x16xf32> to vector<1x16x16xf32>
    tpu.vector_store %arg8[%c3_171, %c1_172, %c1_173], %306 {strides = array<i32>} : memref<4x18x18xf32, #tpu.memory_space<vmem>>, vector<1x16x16xf32>,
    %c0_174 = arith.constant 0 : index
    %307 = memref.load %arg4[%c0_174] : memref<36xf32, #tpu.memory_space<smem>>
    %c0_175 = arith.constant 0 : index
    %c0_176 = arith.constant 0 : index
    %c0_177 = arith.constant 0 : index
    %308 = vector.load %arg8[%c0_175, %c0_176, %c0_177] : memref<4x18x18xf32, #tpu.memory_space<vmem>>, vector<1x16x16xf32>
    %309 = vector.shape_cast %308 : vector<1x16x16xf32> to vector<16x16xf32>
    %310 = vector.broadcast %307 : f32 to vector<16x16xf32>
    %311 = arith.mulf %309, %310 : vector<16x16xf32>
    %c1_178 = arith.constant 1 : index
    %312 = memref.load %arg4[%c1_178] : memref<36xf32, #tpu.memory_space<smem>>
    %c0_179 = arith.constant 0 : index
    %c0_180 = arith.constant 0 : index
    %c1_181 = arith.constant 1 : index
    %313 = vector.load %arg8[%c0_179, %c0_180, %c1_181] : memref<4x18x18xf32, #tpu.memory_space<vmem>>, vector<1x16x16xf32>
    %314 = vector.shape_cast %313 : vector<1x16x16xf32> to vector<16x16xf32>
    %315 = vector.broadcast %312 : f32 to vector<16x16xf32>
    %316 = arith.mulf %314, %315 : vector<16x16xf32>
    %317 = arith.addf %311, %316 : vector<16x16xf32>
    %c2_182 = arith.constant 2 : index
    %318 = memref.load %arg4[%c2_182] : memref<36xf32, #tpu.memory_space<smem>>
    %c0_183 = arith.constant 0 : index
    %c0_184 = arith.constant 0 : index
    %c2_185 = arith.constant 2 : index
    %319 = vector.load %arg8[%c0_183, %c0_184, %c2_185] : memref<4x18x18xf32, #tpu.memory_space<vmem>>, vector<1x16x16xf32>
    %320 = vector.shape_cast %319 : vector<1x16x16xf32> to vector<16x16xf32>
    %321 = vector.broadcast %318 : f32 to vector<16x16xf32>
    %322 = arith.mulf %320, %321 : vector<16x16xf32>
    %323 = arith.addf %317, %322 : vector<16x16xf32>
    %c3_186 = arith.constant 3 : index
    %324 = memref.load %arg4[%c3_186] : memref<36xf32, #tpu.memory_space<smem>>
    %c0_187 = arith.constant 0 : index
    %c1_188 = arith.constant 1 : index
    %c0_189 = arith.constant 0 : index
    %325 = vector.load %arg8[%c0_187, %c1_188, %c0_189] : memref<4x18x18xf32, #tpu.memory_space<vmem>>, vector<1x16x16xf32>
    %326 = vector.shape_cast %325 : vector<1x16x16xf32> to vector<16x16xf32>
    %327 = vector.broadcast %324 : f32 to vector<16x16xf32>
    %328 = arith.mulf %326, %327 : vector<16x16xf32>
    %329 = arith.addf %323, %328 : vector<16x16xf32>
    %c4_190 = arith.constant 4 : index
    %330 = memref.load %arg4[%c4_190] : memref<36xf32, #tpu.memory_space<smem>>
    %c0_191 = arith.constant 0 : index
    %c1_192 = arith.constant 1 : index
    %c1_193 = arith.constant 1 : index
    %331 = vector.load %arg8[%c0_191, %c1_192, %c1_193] : memref<4x18x18xf32, #tpu.memory_space<vmem>>, vector<1x16x16xf32>
    %332 = vector.shape_cast %331 : vector<1x16x16xf32> to vector<16x16xf32>
    %333 = vector.broadcast %330 : f32 to vector<16x16xf32>
    %334 = arith.mulf %332, %333 : vector<16x16xf32>
    %335 = arith.addf %329, %334 : vector<16x16xf32>
    %c5_194 = arith.constant 5 : index
    %336 = memref.load %arg4[%c5_194] : memref<36xf32, #tpu.memory_space<smem>>
    %c0_195 = arith.constant 0 : index
    %c1_196 = arith.constant 1 : index
    %c2_197 = arith.constant 2 : index
    %337 = vector.load %arg8[%c0_195, %c1_196, %c2_197] : memref<4x18x18xf32, #tpu.memory_space<vmem>>, vector<1x16x16xf32>
    %338 = vector.shape_cast %337 : vector<1x16x16xf32> to vector<16x16xf32>
    %339 = vector.broadcast %336 : f32 to vector<16x16xf32>
    %340 = arith.mulf %338, %339 : vector<16x16xf32>
    %341 = arith.addf %335, %340 : vector<16x16xf32>
    %c6_198 = arith.constant 6 : index
    %342 = memref.load %arg4[%c6_198] : memref<36xf32, #tpu.memory_space<smem>>
    %c0_199 = arith.constant 0 : index
    %c2_200 = arith.constant 2 : index
    %c0_201 = arith.constant 0 : index
    %343 = vector.load %arg8[%c0_199, %c2_200, %c0_201] : memref<4x18x18xf32, #tpu.memory_space<vmem>>, vector<1x16x16xf32>
    %344 = vector.shape_cast %343 : vector<1x16x16xf32> to vector<16x16xf32>
    %345 = vector.broadcast %342 : f32 to vector<16x16xf32>
    %346 = arith.mulf %344, %345 : vector<16x16xf32>
    %347 = arith.addf %341, %346 : vector<16x16xf32>
    %c7_202 = arith.constant 7 : index
    %348 = memref.load %arg4[%c7_202] : memref<36xf32, #tpu.memory_space<smem>>
    %c0_203 = arith.constant 0 : index
    %c2_204 = arith.constant 2 : index
    %c1_205 = arith.constant 1 : index
    %349 = vector.load %arg8[%c0_203, %c2_204, %c1_205] : memref<4x18x18xf32, #tpu.memory_space<vmem>>, vector<1x16x16xf32>
    %350 = vector.shape_cast %349 : vector<1x16x16xf32> to vector<16x16xf32>
    %351 = vector.broadcast %348 : f32 to vector<16x16xf32>
    %352 = arith.mulf %350, %351 : vector<16x16xf32>
    %353 = arith.addf %347, %352 : vector<16x16xf32>
    %c8_206 = arith.constant 8 : index
    %354 = memref.load %arg4[%c8_206] : memref<36xf32, #tpu.memory_space<smem>>
    %c0_207 = arith.constant 0 : index
    %c2_208 = arith.constant 2 : index
    %c2_209 = arith.constant 2 : index
    %355 = vector.load %arg8[%c0_207, %c2_208, %c2_209] : memref<4x18x18xf32, #tpu.memory_space<vmem>>, vector<1x16x16xf32>
    %356 = vector.shape_cast %355 : vector<1x16x16xf32> to vector<16x16xf32>
    %357 = vector.broadcast %354 : f32 to vector<16x16xf32>
    %358 = arith.mulf %356, %357 : vector<16x16xf32>
    %359 = arith.addf %353, %358 : vector<16x16xf32>
    %c9_210 = arith.constant 9 : index
    %360 = memref.load %arg4[%c9_210] : memref<36xf32, #tpu.memory_space<smem>>
    %c1_211 = arith.constant 1 : index
    %c0_212 = arith.constant 0 : index
    %c0_213 = arith.constant 0 : index
    %361 = vector.load %arg8[%c1_211, %c0_212, %c0_213] : memref<4x18x18xf32, #tpu.memory_space<vmem>>, vector<1x16x16xf32>
    %362 = vector.shape_cast %361 : vector<1x16x16xf32> to vector<16x16xf32>
    %363 = vector.broadcast %360 : f32 to vector<16x16xf32>
    %364 = arith.mulf %362, %363 : vector<16x16xf32>
    %c10_214 = arith.constant 10 : index
    %365 = memref.load %arg4[%c10_214] : memref<36xf32, #tpu.memory_space<smem>>
    %c1_215 = arith.constant 1 : index
    %c0_216 = arith.constant 0 : index
    %c1_217 = arith.constant 1 : index
    %366 = vector.load %arg8[%c1_215, %c0_216, %c1_217] : memref<4x18x18xf32, #tpu.memory_space<vmem>>, vector<1x16x16xf32>
    %367 = vector.shape_cast %366 : vector<1x16x16xf32> to vector<16x16xf32>
    %368 = vector.broadcast %365 : f32 to vector<16x16xf32>
    %369 = arith.mulf %367, %368 : vector<16x16xf32>
    %370 = arith.addf %364, %369 : vector<16x16xf32>
    %c11_218 = arith.constant 11 : index
    %371 = memref.load %arg4[%c11_218] : memref<36xf32, #tpu.memory_space<smem>>
    %c1_219 = arith.constant 1 : index
    %c0_220 = arith.constant 0 : index
    %c2_221 = arith.constant 2 : index
    %372 = vector.load %arg8[%c1_219, %c0_220, %c2_221] : memref<4x18x18xf32, #tpu.memory_space<vmem>>, vector<1x16x16xf32>
    %373 = vector.shape_cast %372 : vector<1x16x16xf32> to vector<16x16xf32>
    %374 = vector.broadcast %371 : f32 to vector<16x16xf32>
    %375 = arith.mulf %373, %374 : vector<16x16xf32>
    %376 = arith.addf %370, %375 : vector<16x16xf32>
    %c12_222 = arith.constant 12 : index
    %377 = memref.load %arg4[%c12_222] : memref<36xf32, #tpu.memory_space<smem>>
    %c1_223 = arith.constant 1 : index
    %c1_224 = arith.constant 1 : index
    %c0_225 = arith.constant 0 : index
    %378 = vector.load %arg8[%c1_223, %c1_224, %c0_225] : memref<4x18x18xf32, #tpu.memory_space<vmem>>, vector<1x16x16xf32>
    %379 = vector.shape_cast %378 : vector<1x16x16xf32> to vector<16x16xf32>
    %380 = vector.broadcast %377 : f32 to vector<16x16xf32>
    %381 = arith.mulf %379, %380 : vector<16x16xf32>
    %382 = arith.addf %376, %381 : vector<16x16xf32>
    %c13_226 = arith.constant 13 : index
    %383 = memref.load %arg4[%c13_226] : memref<36xf32, #tpu.memory_space<smem>>
    %c1_227 = arith.constant 1 : index
    %c1_228 = arith.constant 1 : index
    %c1_229 = arith.constant 1 : index
    %384 = vector.load %arg8[%c1_227, %c1_228, %c1_229] : memref<4x18x18xf32, #tpu.memory_space<vmem>>, vector<1x16x16xf32>
    %385 = vector.shape_cast %384 : vector<1x16x16xf32> to vector<16x16xf32>
    %386 = vector.broadcast %383 : f32 to vector<16x16xf32>
    %387 = arith.mulf %385, %386 : vector<16x16xf32>
    %388 = arith.addf %382, %387 : vector<16x16xf32>
    %c14_230 = arith.constant 14 : index
    %389 = memref.load %arg4[%c14_230] : memref<36xf32, #tpu.memory_space<smem>>
    %c1_231 = arith.constant 1 : index
    %c1_232 = arith.constant 1 : index
    %c2_233 = arith.constant 2 : index
    %390 = vector.load %arg8[%c1_231, %c1_232, %c2_233] : memref<4x18x18xf32, #tpu.memory_space<vmem>>, vector<1x16x16xf32>
    %391 = vector.shape_cast %390 : vector<1x16x16xf32> to vector<16x16xf32>
    %392 = vector.broadcast %389 : f32 to vector<16x16xf32>
    %393 = arith.mulf %391, %392 : vector<16x16xf32>
    %394 = arith.addf %388, %393 : vector<16x16xf32>
    %c15_234 = arith.constant 15 : index
    %395 = memref.load %arg4[%c15_234] : memref<36xf32, #tpu.memory_space<smem>>
    %c1_235 = arith.constant 1 : index
    %c2_236 = arith.constant 2 : index
    %c0_237 = arith.constant 0 : index
    %396 = vector.load %arg8[%c1_235, %c2_236, %c0_237] : memref<4x18x18xf32, #tpu.memory_space<vmem>>, vector<1x16x16xf32>
    %397 = vector.shape_cast %396 : vector<1x16x16xf32> to vector<16x16xf32>
    %398 = vector.broadcast %395 : f32 to vector<16x16xf32>
    %399 = arith.mulf %397, %398 : vector<16x16xf32>
    %400 = arith.addf %394, %399 : vector<16x16xf32>
    %c16_238 = arith.constant 16 : index
    %401 = memref.load %arg4[%c16_238] : memref<36xf32, #tpu.memory_space<smem>>
    %c1_239 = arith.constant 1 : index
    %c2_240 = arith.constant 2 : index
    %c1_241 = arith.constant 1 : index
    %402 = vector.load %arg8[%c1_239, %c2_240, %c1_241] : memref<4x18x18xf32, #tpu.memory_space<vmem>>, vector<1x16x16xf32>
    %403 = vector.shape_cast %402 : vector<1x16x16xf32> to vector<16x16xf32>
    %404 = vector.broadcast %401 : f32 to vector<16x16xf32>
    %405 = arith.mulf %403, %404 : vector<16x16xf32>
    %406 = arith.addf %400, %405 : vector<16x16xf32>
    %c17_242 = arith.constant 17 : index
    %407 = memref.load %arg4[%c17_242] : memref<36xf32, #tpu.memory_space<smem>>
    %c1_243 = arith.constant 1 : index
    %c2_244 = arith.constant 2 : index
    %c2_245 = arith.constant 2 : index
    %408 = vector.load %arg8[%c1_243, %c2_244, %c2_245] : memref<4x18x18xf32, #tpu.memory_space<vmem>>, vector<1x16x16xf32>
    %409 = vector.shape_cast %408 : vector<1x16x16xf32> to vector<16x16xf32>
    %410 = vector.broadcast %407 : f32 to vector<16x16xf32>
    %411 = arith.mulf %409, %410 : vector<16x16xf32>
    %412 = arith.addf %406, %411 : vector<16x16xf32>
    %c18_246 = arith.constant 18 : index
    %413 = memref.load %arg4[%c18_246] : memref<36xf32, #tpu.memory_space<smem>>
    %c2_247 = arith.constant 2 : index
    %c0_248 = arith.constant 0 : index
    %c0_249 = arith.constant 0 : index
    %414 = vector.load %arg8[%c2_247, %c0_248, %c0_249] : memref<4x18x18xf32, #tpu.memory_space<vmem>>, vector<1x16x16xf32>
    %415 = vector.shape_cast %414 : vector<1x16x16xf32> to vector<16x16xf32>
    %416 = vector.broadcast %413 : f32 to vector<16x16xf32>
    %417 = arith.mulf %415, %416 : vector<16x16xf32>
    %c19_250 = arith.constant 19 : index
    %418 = memref.load %arg4[%c19_250] : memref<36xf32, #tpu.memory_space<smem>>
    %c2_251 = arith.constant 2 : index
    %c0_252 = arith.constant 0 : index
    %c1_253 = arith.constant 1 : index
    %419 = vector.load %arg8[%c2_251, %c0_252, %c1_253] : memref<4x18x18xf32, #tpu.memory_space<vmem>>, vector<1x16x16xf32>
    %420 = vector.shape_cast %419 : vector<1x16x16xf32> to vector<16x16xf32>
    %421 = vector.broadcast %418 : f32 to vector<16x16xf32>
    %422 = arith.mulf %420, %421 : vector<16x16xf32>
    %423 = arith.addf %417, %422 : vector<16x16xf32>
    %c20_254 = arith.constant 20 : index
    %424 = memref.load %arg4[%c20_254] : memref<36xf32, #tpu.memory_space<smem>>
    %c2_255 = arith.constant 2 : index
    %c0_256 = arith.constant 0 : index
    %c2_257 = arith.constant 2 : index
    %425 = vector.load %arg8[%c2_255, %c0_256, %c2_257] : memref<4x18x18xf32, #tpu.memory_space<vmem>>, vector<1x16x16xf32>
    %426 = vector.shape_cast %425 : vector<1x16x16xf32> to vector<16x16xf32>
    %427 = vector.broadcast %424 : f32 to vector<16x16xf32>
    %428 = arith.mulf %426, %427 : vector<16x16xf32>
    %429 = arith.addf %423, %428 : vector<16x16xf32>
    %c21_258 = arith.constant 21 : index
    %430 = memref.load %arg4[%c21_258] : memref<36xf32, #tpu.memory_space<smem>>
    %c2_259 = arith.constant 2 : index
    %c1_260 = arith.constant 1 : index
    %c0_261 = arith.constant 0 : index
    %431 = vector.load %arg8[%c2_259, %c1_260, %c0_261] : memref<4x18x18xf32, #tpu.memory_space<vmem>>, vector<1x16x16xf32>
    %432 = vector.shape_cast %431 : vector<1x16x16xf32> to vector<16x16xf32>
    %433 = vector.broadcast %430 : f32 to vector<16x16xf32>
    %434 = arith.mulf %432, %433 : vector<16x16xf32>
    %435 = arith.addf %429, %434 : vector<16x16xf32>
    %c22_262 = arith.constant 22 : index
    %436 = memref.load %arg4[%c22_262] : memref<36xf32, #tpu.memory_space<smem>>
    %c2_263 = arith.constant 2 : index
    %c1_264 = arith.constant 1 : index
    %c1_265 = arith.constant 1 : index
    %437 = vector.load %arg8[%c2_263, %c1_264, %c1_265] : memref<4x18x18xf32, #tpu.memory_space<vmem>>, vector<1x16x16xf32>
    %438 = vector.shape_cast %437 : vector<1x16x16xf32> to vector<16x16xf32>
    %439 = vector.broadcast %436 : f32 to vector<16x16xf32>
    %440 = arith.mulf %438, %439 : vector<16x16xf32>
    %441 = arith.addf %435, %440 : vector<16x16xf32>
    %c23_266 = arith.constant 23 : index
    %442 = memref.load %arg4[%c23_266] : memref<36xf32, #tpu.memory_space<smem>>
    %c2_267 = arith.constant 2 : index
    %c1_268 = arith.constant 1 : index
    %c2_269 = arith.constant 2 : index
    %443 = vector.load %arg8[%c2_267, %c1_268, %c2_269] : memref<4x18x18xf32, #tpu.memory_space<vmem>>, vector<1x16x16xf32>
    %444 = vector.shape_cast %443 : vector<1x16x16xf32> to vector<16x16xf32>
    %445 = vector.broadcast %442 : f32 to vector<16x16xf32>
    %446 = arith.mulf %444, %445 : vector<16x16xf32>
    %447 = arith.addf %441, %446 : vector<16x16xf32>
    %c24_270 = arith.constant 24 : index
    %448 = memref.load %arg4[%c24_270] : memref<36xf32, #tpu.memory_space<smem>>
    %c2_271 = arith.constant 2 : index
    %c2_272 = arith.constant 2 : index
    %c0_273 = arith.constant 0 : index
    %449 = vector.load %arg8[%c2_271, %c2_272, %c0_273] : memref<4x18x18xf32, #tpu.memory_space<vmem>>, vector<1x16x16xf32>
    %450 = vector.shape_cast %449 : vector<1x16x16xf32> to vector<16x16xf32>
    %451 = vector.broadcast %448 : f32 to vector<16x16xf32>
    %452 = arith.mulf %450, %451 : vector<16x16xf32>
    %453 = arith.addf %447, %452 : vector<16x16xf32>
    %c25_274 = arith.constant 25 : index
    %454 = memref.load %arg4[%c25_274] : memref<36xf32, #tpu.memory_space<smem>>
    %c2_275 = arith.constant 2 : index
    %c2_276 = arith.constant 2 : index
    %c1_277 = arith.constant 1 : index
    %455 = vector.load %arg8[%c2_275, %c2_276, %c1_277] : memref<4x18x18xf32, #tpu.memory_space<vmem>>, vector<1x16x16xf32>
    %456 = vector.shape_cast %455 : vector<1x16x16xf32> to vector<16x16xf32>
    %457 = vector.broadcast %454 : f32 to vector<16x16xf32>
    %458 = arith.mulf %456, %457 : vector<16x16xf32>
    %459 = arith.addf %453, %458 : vector<16x16xf32>
    %c26_278 = arith.constant 26 : index
    %460 = memref.load %arg4[%c26_278] : memref<36xf32, #tpu.memory_space<smem>>
    %c2_279 = arith.constant 2 : index
    %c2_280 = arith.constant 2 : index
    %c2_281 = arith.constant 2 : index
    %461 = vector.load %arg8[%c2_279, %c2_280, %c2_281] : memref<4x18x18xf32, #tpu.memory_space<vmem>>, vector<1x16x16xf32>
    %462 = vector.shape_cast %461 : vector<1x16x16xf32> to vector<16x16xf32>
    %463 = vector.broadcast %460 : f32 to vector<16x16xf32>
    %464 = arith.mulf %462, %463 : vector<16x16xf32>
    %465 = arith.addf %459, %464 : vector<16x16xf32>
    %c27_282 = arith.constant 27 : index
    %466 = memref.load %arg4[%c27_282] : memref<36xf32, #tpu.memory_space<smem>>
    %c3_283 = arith.constant 3 : index
    %c0_284 = arith.constant 0 : index
    %c0_285 = arith.constant 0 : index
    %467 = vector.load %arg8[%c3_283, %c0_284, %c0_285] : memref<4x18x18xf32, #tpu.memory_space<vmem>>, vector<1x16x16xf32>
    %468 = vector.shape_cast %467 : vector<1x16x16xf32> to vector<16x16xf32>
    %469 = vector.broadcast %466 : f32 to vector<16x16xf32>
    %470 = arith.mulf %468, %469 : vector<16x16xf32>
    %c28_286 = arith.constant 28 : index
    %471 = memref.load %arg4[%c28_286] : memref<36xf32, #tpu.memory_space<smem>>
    %c3_287 = arith.constant 3 : index
    %c0_288 = arith.constant 0 : index
    %c1_289 = arith.constant 1 : index
    %472 = vector.load %arg8[%c3_287, %c0_288, %c1_289] : memref<4x18x18xf32, #tpu.memory_space<vmem>>, vector<1x16x16xf32>
    %473 = vector.shape_cast %472 : vector<1x16x16xf32> to vector<16x16xf32>
    %474 = vector.broadcast %471 : f32 to vector<16x16xf32>
    %475 = arith.mulf %473, %474 : vector<16x16xf32>
    %476 = arith.addf %470, %475 : vector<16x16xf32>
    %c29_290 = arith.constant 29 : index
    %477 = memref.load %arg4[%c29_290] : memref<36xf32, #tpu.memory_space<smem>>
    %c3_291 = arith.constant 3 : index
    %c0_292 = arith.constant 0 : index
    %c2_293 = arith.constant 2 : index
    %478 = vector.load %arg8[%c3_291, %c0_292, %c2_293] : memref<4x18x18xf32, #tpu.memory_space<vmem>>, vector<1x16x16xf32>
    %479 = vector.shape_cast %478 : vector<1x16x16xf32> to vector<16x16xf32>
    %480 = vector.broadcast %477 : f32 to vector<16x16xf32>
    %481 = arith.mulf %479, %480 : vector<16x16xf32>
    %482 = arith.addf %476, %481 : vector<16x16xf32>
    %c30_294 = arith.constant 30 : index
    %483 = memref.load %arg4[%c30_294] : memref<36xf32, #tpu.memory_space<smem>>
    %c3_295 = arith.constant 3 : index
    %c1_296 = arith.constant 1 : index
    %c0_297 = arith.constant 0 : index
    %484 = vector.load %arg8[%c3_295, %c1_296, %c0_297] : memref<4x18x18xf32, #tpu.memory_space<vmem>>, vector<1x16x16xf32>
    %485 = vector.shape_cast %484 : vector<1x16x16xf32> to vector<16x16xf32>
    %486 = vector.broadcast %483 : f32 to vector<16x16xf32>
    %487 = arith.mulf %485, %486 : vector<16x16xf32>
    %488 = arith.addf %482, %487 : vector<16x16xf32>
    %c31_298 = arith.constant 31 : index
    %489 = memref.load %arg4[%c31_298] : memref<36xf32, #tpu.memory_space<smem>>
    %c3_299 = arith.constant 3 : index
    %c1_300 = arith.constant 1 : index
    %c1_301 = arith.constant 1 : index
    %490 = vector.load %arg8[%c3_299, %c1_300, %c1_301] : memref<4x18x18xf32, #tpu.memory_space<vmem>>, vector<1x16x16xf32>
    %491 = vector.shape_cast %490 : vector<1x16x16xf32> to vector<16x16xf32>
    %492 = vector.broadcast %489 : f32 to vector<16x16xf32>
    %493 = arith.mulf %491, %492 : vector<16x16xf32>
    %494 = arith.addf %488, %493 : vector<16x16xf32>
    %c32_302 = arith.constant 32 : index
    %495 = memref.load %arg4[%c32_302] : memref<36xf32, #tpu.memory_space<smem>>
    %c3_303 = arith.constant 3 : index
    %c1_304 = arith.constant 1 : index
    %c2_305 = arith.constant 2 : index
    %496 = vector.load %arg8[%c3_303, %c1_304, %c2_305] : memref<4x18x18xf32, #tpu.memory_space<vmem>>, vector<1x16x16xf32>
    %497 = vector.shape_cast %496 : vector<1x16x16xf32> to vector<16x16xf32>
    %498 = vector.broadcast %495 : f32 to vector<16x16xf32>
    %499 = arith.mulf %497, %498 : vector<16x16xf32>
    %500 = arith.addf %494, %499 : vector<16x16xf32>
    %c33_306 = arith.constant 33 : index
    %501 = memref.load %arg4[%c33_306] : memref<36xf32, #tpu.memory_space<smem>>
    %c3_307 = arith.constant 3 : index
    %c2_308 = arith.constant 2 : index
    %c0_309 = arith.constant 0 : index
    %502 = vector.load %arg8[%c3_307, %c2_308, %c0_309] : memref<4x18x18xf32, #tpu.memory_space<vmem>>, vector<1x16x16xf32>
    %503 = vector.shape_cast %502 : vector<1x16x16xf32> to vector<16x16xf32>
    %504 = vector.broadcast %501 : f32 to vector<16x16xf32>
    %505 = arith.mulf %503, %504 : vector<16x16xf32>
    %506 = arith.addf %500, %505 : vector<16x16xf32>
    %c34_310 = arith.constant 34 : index
    %507 = memref.load %arg4[%c34_310] : memref<36xf32, #tpu.memory_space<smem>>
    %c3_311 = arith.constant 3 : index
    %c2_312 = arith.constant 2 : index
    %c1_313 = arith.constant 1 : index
    %508 = vector.load %arg8[%c3_311, %c2_312, %c1_313] : memref<4x18x18xf32, #tpu.memory_space<vmem>>, vector<1x16x16xf32>
    %509 = vector.shape_cast %508 : vector<1x16x16xf32> to vector<16x16xf32>
    %510 = vector.broadcast %507 : f32 to vector<16x16xf32>
    %511 = arith.mulf %509, %510 : vector<16x16xf32>
    %512 = arith.addf %506, %511 : vector<16x16xf32>
    %c35_314 = arith.constant 35 : index
    %513 = memref.load %arg4[%c35_314] : memref<36xf32, #tpu.memory_space<smem>>
    %c3_315 = arith.constant 3 : index
    %c2_316 = arith.constant 2 : index
    %c2_317 = arith.constant 2 : index
    %514 = vector.load %arg8[%c3_315, %c2_316, %c2_317] : memref<4x18x18xf32, #tpu.memory_space<vmem>>, vector<1x16x16xf32>
    %515 = vector.shape_cast %514 : vector<1x16x16xf32> to vector<16x16xf32>
    %516 = vector.broadcast %513 : f32 to vector<16x16xf32>
    %517 = arith.mulf %515, %516 : vector<16x16xf32>
    %518 = arith.addf %512, %517 : vector<16x16xf32>
    %c0_318 = arith.constant 0 : index
    %519 = memref.load %arg5[%c0_318] : memref<32xf32, #tpu.memory_space<smem>>
    %520 = vector.broadcast %519 : f32 to vector<16x16xf32>
    %521 = arith.mulf %359, %520 : vector<16x16xf32>
    %c1_319 = arith.constant 1 : index
    %522 = memref.load %arg5[%c1_319] : memref<32xf32, #tpu.memory_space<smem>>
    %523 = vector.broadcast %522 : f32 to vector<16x16xf32>
    %524 = arith.mulf %412, %523 : vector<16x16xf32>
    %525 = arith.addf %521, %524 : vector<16x16xf32>
    %c2_320 = arith.constant 2 : index
    %526 = memref.load %arg5[%c2_320] : memref<32xf32, #tpu.memory_space<smem>>
    %527 = vector.broadcast %526 : f32 to vector<16x16xf32>
    %528 = arith.mulf %465, %527 : vector<16x16xf32>
    %529 = arith.addf %525, %528 : vector<16x16xf32>
    %c3_321 = arith.constant 3 : index
    %530 = memref.load %arg5[%c3_321] : memref<32xf32, #tpu.memory_space<smem>>
    %531 = vector.broadcast %530 : f32 to vector<16x16xf32>
    %532 = arith.mulf %518, %531 : vector<16x16xf32>
    %533 = arith.addf %529, %532 : vector<16x16xf32>
    %c0_322 = arith.constant 0 : index
    %c0_323 = arith.constant 0 : index
    %c0_324 = arith.constant 0 : index
    %c0_325 = arith.constant 0 : index
    %534 = vector.load %arg6[%c0_322, %c0_323, %c0_324, %c0_325] : memref<1x8x16x16xf32, #tpu.memory_space<vmem>>, vector<1x1x16x16xf32>
    %535 = vector.shape_cast %534 : vector<1x1x16x16xf32> to vector<16x16xf32>
    %536 = vector.shape_cast %533 : vector<16x16xf32> to vector<1x1x16x16xf32>
    tpu.vector_store %arg6[%c0_322, %c0_323, %c0_324, %c0_325], %536 {strides = array<i32>} : memref<1x8x16x16xf32, #tpu.memory_space<vmem>>, vector<1x1x16x16xf32>,
    %c4_326 = arith.constant 4 : index
    %537 = memref.load %arg5[%c4_326] : memref<32xf32, #tpu.memory_space<smem>>
    %538 = vector.broadcast %537 : f32 to vector<16x16xf32>
    %539 = arith.mulf %359, %538 : vector<16x16xf32>
    %c5_327 = arith.constant 5 : index
    %540 = memref.load %arg5[%c5_327] : memref<32xf32, #tpu.memory_space<smem>>
    %541 = vector.broadcast %540 : f32 to vector<16x16xf32>
    %542 = arith.mulf %412, %541 : vector<16x16xf32>
    %543 = arith.addf %539, %542 : vector<16x16xf32>
    %c6_328 = arith.constant 6 : index
    %544 = memref.load %arg5[%c6_328] : memref<32xf32, #tpu.memory_space<smem>>
    %545 = vector.broadcast %544 : f32 to vector<16x16xf32>
    %546 = arith.mulf %465, %545 : vector<16x16xf32>
    %547 = arith.addf %543, %546 : vector<16x16xf32>
    %c7_329 = arith.constant 7 : index
    %548 = memref.load %arg5[%c7_329] : memref<32xf32, #tpu.memory_space<smem>>
    %549 = vector.broadcast %548 : f32 to vector<16x16xf32>
    %550 = arith.mulf %518, %549 : vector<16x16xf32>
    %551 = arith.addf %547, %550 : vector<16x16xf32>
    %c0_330 = arith.constant 0 : index
    %c1_331 = arith.constant 1 : index
    %c0_332 = arith.constant 0 : index
    %c0_333 = arith.constant 0 : index
    %552 = vector.load %arg6[%c0_330, %c1_331, %c0_332, %c0_333] : memref<1x8x16x16xf32, #tpu.memory_space<vmem>>, vector<1x1x16x16xf32>
    %553 = vector.shape_cast %552 : vector<1x1x16x16xf32> to vector<16x16xf32>
    %554 = vector.shape_cast %551 : vector<16x16xf32> to vector<1x1x16x16xf32>
    tpu.vector_store %arg6[%c0_330, %c1_331, %c0_332, %c0_333], %554 {strides = array<i32>} : memref<1x8x16x16xf32, #tpu.memory_space<vmem>>, vector<1x1x16x16xf32>,
    %c8_334 = arith.constant 8 : index
    %555 = memref.load %arg5[%c8_334] : memref<32xf32, #tpu.memory_space<smem>>
    %556 = vector.broadcast %555 : f32 to vector<16x16xf32>
    %557 = arith.mulf %359, %556 : vector<16x16xf32>
    %c9_335 = arith.constant 9 : index
    %558 = memref.load %arg5[%c9_335] : memref<32xf32, #tpu.memory_space<smem>>
    %559 = vector.broadcast %558 : f32 to vector<16x16xf32>
    %560 = arith.mulf %412, %559 : vector<16x16xf32>
    %561 = arith.addf %557, %560 : vector<16x16xf32>
    %c10_336 = arith.constant 10 : index
    %562 = memref.load %arg5[%c10_336] : memref<32xf32, #tpu.memory_space<smem>>
    %563 = vector.broadcast %562 : f32 to vector<16x16xf32>
    %564 = arith.mulf %465, %563 : vector<16x16xf32>
    %565 = arith.addf %561, %564 : vector<16x16xf32>
    %c11_337 = arith.constant 11 : index
    %566 = memref.load %arg5[%c11_337] : memref<32xf32, #tpu.memory_space<smem>>
    %567 = vector.broadcast %566 : f32 to vector<16x16xf32>
    %568 = arith.mulf %518, %567 : vector<16x16xf32>
    %569 = arith.addf %565, %568 : vector<16x16xf32>
    %c0_338 = arith.constant 0 : index
    %c2_339 = arith.constant 2 : index
    %c0_340 = arith.constant 0 : index
    %c0_341 = arith.constant 0 : index
    %570 = vector.load %arg6[%c0_338, %c2_339, %c0_340, %c0_341] : memref<1x8x16x16xf32, #tpu.memory_space<vmem>>, vector<1x1x16x16xf32>
    %571 = vector.shape_cast %570 : vector<1x1x16x16xf32> to vector<16x16xf32>
    %572 = vector.shape_cast %569 : vector<16x16xf32> to vector<1x1x16x16xf32>
    tpu.vector_store %arg6[%c0_338, %c2_339, %c0_340, %c0_341], %572 {strides = array<i32>} : memref<1x8x16x16xf32, #tpu.memory_space<vmem>>, vector<1x1x16x16xf32>,
    %c12_342 = arith.constant 12 : index
    %573 = memref.load %arg5[%c12_342] : memref<32xf32, #tpu.memory_space<smem>>
    %574 = vector.broadcast %573 : f32 to vector<16x16xf32>
    %575 = arith.mulf %359, %574 : vector<16x16xf32>
    %c13_343 = arith.constant 13 : index
    %576 = memref.load %arg5[%c13_343] : memref<32xf32, #tpu.memory_space<smem>>
    %577 = vector.broadcast %576 : f32 to vector<16x16xf32>
    %578 = arith.mulf %412, %577 : vector<16x16xf32>
    %579 = arith.addf %575, %578 : vector<16x16xf32>
    %c14_344 = arith.constant 14 : index
    %580 = memref.load %arg5[%c14_344] : memref<32xf32, #tpu.memory_space<smem>>
    %581 = vector.broadcast %580 : f32 to vector<16x16xf32>
    %582 = arith.mulf %465, %581 : vector<16x16xf32>
    %583 = arith.addf %579, %582 : vector<16x16xf32>
    %c15_345 = arith.constant 15 : index
    %584 = memref.load %arg5[%c15_345] : memref<32xf32, #tpu.memory_space<smem>>
    %585 = vector.broadcast %584 : f32 to vector<16x16xf32>
    %586 = arith.mulf %518, %585 : vector<16x16xf32>
    %587 = arith.addf %583, %586 : vector<16x16xf32>
    %c0_346 = arith.constant 0 : index
    %c3_347 = arith.constant 3 : index
    %c0_348 = arith.constant 0 : index
    %c0_349 = arith.constant 0 : index
    %588 = vector.load %arg6[%c0_346, %c3_347, %c0_348, %c0_349] : memref<1x8x16x16xf32, #tpu.memory_space<vmem>>, vector<1x1x16x16xf32>
    %589 = vector.shape_cast %588 : vector<1x1x16x16xf32> to vector<16x16xf32>
    %590 = vector.shape_cast %587 : vector<16x16xf32> to vector<1x1x16x16xf32>
    tpu.vector_store %arg6[%c0_346, %c3_347, %c0_348, %c0_349], %590 {strides = array<i32>} : memref<1x8x16x16xf32, #tpu.memory_space<vmem>>, vector<1x1x16x16xf32>,
    %c16_350 = arith.constant 16 : index
    %591 = memref.load %arg5[%c16_350] : memref<32xf32, #tpu.memory_space<smem>>
    %592 = vector.broadcast %591 : f32 to vector<16x16xf32>
    %593 = arith.mulf %359, %592 : vector<16x16xf32>
    %c17_351 = arith.constant 17 : index
    %594 = memref.load %arg5[%c17_351] : memref<32xf32, #tpu.memory_space<smem>>
    %595 = vector.broadcast %594 : f32 to vector<16x16xf32>
    %596 = arith.mulf %412, %595 : vector<16x16xf32>
    %597 = arith.addf %593, %596 : vector<16x16xf32>
    %c18_352 = arith.constant 18 : index
    %598 = memref.load %arg5[%c18_352] : memref<32xf32, #tpu.memory_space<smem>>
    %599 = vector.broadcast %598 : f32 to vector<16x16xf32>
    %600 = arith.mulf %465, %599 : vector<16x16xf32>
    %601 = arith.addf %597, %600 : vector<16x16xf32>
    %c19_353 = arith.constant 19 : index
    %602 = memref.load %arg5[%c19_353] : memref<32xf32, #tpu.memory_space<smem>>
    %603 = vector.broadcast %602 : f32 to vector<16x16xf32>
    %604 = arith.mulf %518, %603 : vector<16x16xf32>
    %605 = arith.addf %601, %604 : vector<16x16xf32>
    %c0_354 = arith.constant 0 : index
    %c4_355 = arith.constant 4 : index
    %c0_356 = arith.constant 0 : index
    %c0_357 = arith.constant 0 : index
    %606 = vector.load %arg6[%c0_354, %c4_355, %c0_356, %c0_357] : memref<1x8x16x16xf32, #tpu.memory_space<vmem>>, vector<1x1x16x16xf32>
    %607 = vector.shape_cast %606 : vector<1x1x16x16xf32> to vector<16x16xf32>
    %608 = vector.shape_cast %605 : vector<16x16xf32> to vector<1x1x16x16xf32>
    tpu.vector_store %arg6[%c0_354, %c4_355, %c0_356, %c0_357], %608 {strides = array<i32>} : memref<1x8x16x16xf32, #tpu.memory_space<vmem>>, vector<1x1x16x16xf32>,
    %c20_358 = arith.constant 20 : index
    %609 = memref.load %arg5[%c20_358] : memref<32xf32, #tpu.memory_space<smem>>
    %610 = vector.broadcast %609 : f32 to vector<16x16xf32>
    %611 = arith.mulf %359, %610 : vector<16x16xf32>
    %c21_359 = arith.constant 21 : index
    %612 = memref.load %arg5[%c21_359] : memref<32xf32, #tpu.memory_space<smem>>
    %613 = vector.broadcast %612 : f32 to vector<16x16xf32>
    %614 = arith.mulf %412, %613 : vector<16x16xf32>
    %615 = arith.addf %611, %614 : vector<16x16xf32>
    %c22_360 = arith.constant 22 : index
    %616 = memref.load %arg5[%c22_360] : memref<32xf32, #tpu.memory_space<smem>>
    %617 = vector.broadcast %616 : f32 to vector<16x16xf32>
    %618 = arith.mulf %465, %617 : vector<16x16xf32>
    %619 = arith.addf %615, %618 : vector<16x16xf32>
    %c23_361 = arith.constant 23 : index
    %620 = memref.load %arg5[%c23_361] : memref<32xf32, #tpu.memory_space<smem>>
    %621 = vector.broadcast %620 : f32 to vector<16x16xf32>
    %622 = arith.mulf %518, %621 : vector<16x16xf32>
    %623 = arith.addf %619, %622 : vector<16x16xf32>
    %c0_362 = arith.constant 0 : index
    %c5_363 = arith.constant 5 : index
    %c0_364 = arith.constant 0 : index
    %c0_365 = arith.constant 0 : index
    %624 = vector.load %arg6[%c0_362, %c5_363, %c0_364, %c0_365] : memref<1x8x16x16xf32, #tpu.memory_space<vmem>>, vector<1x1x16x16xf32>
    %625 = vector.shape_cast %624 : vector<1x1x16x16xf32> to vector<16x16xf32>
    %626 = vector.shape_cast %623 : vector<16x16xf32> to vector<1x1x16x16xf32>
    tpu.vector_store %arg6[%c0_362, %c5_363, %c0_364, %c0_365], %626 {strides = array<i32>} : memref<1x8x16x16xf32, #tpu.memory_space<vmem>>, vector<1x1x16x16xf32>,
    %c24_366 = arith.constant 24 : index
    %627 = memref.load %arg5[%c24_366] : memref<32xf32, #tpu.memory_space<smem>>
    %628 = vector.broadcast %627 : f32 to vector<16x16xf32>
    %629 = arith.mulf %359, %628 : vector<16x16xf32>
    %c25_367 = arith.constant 25 : index
    %630 = memref.load %arg5[%c25_367] : memref<32xf32, #tpu.memory_space<smem>>
    %631 = vector.broadcast %630 : f32 to vector<16x16xf32>
    %632 = arith.mulf %412, %631 : vector<16x16xf32>
    %633 = arith.addf %629, %632 : vector<16x16xf32>
    %c26_368 = arith.constant 26 : index
    %634 = memref.load %arg5[%c26_368] : memref<32xf32, #tpu.memory_space<smem>>
    %635 = vector.broadcast %634 : f32 to vector<16x16xf32>
    %636 = arith.mulf %465, %635 : vector<16x16xf32>
    %637 = arith.addf %633, %636 : vector<16x16xf32>
    %c27_369 = arith.constant 27 : index
    %638 = memref.load %arg5[%c27_369] : memref<32xf32, #tpu.memory_space<smem>>
    %639 = vector.broadcast %638 : f32 to vector<16x16xf32>
    %640 = arith.mulf %518, %639 : vector<16x16xf32>
    %641 = arith.addf %637, %640 : vector<16x16xf32>
    %c0_370 = arith.constant 0 : index
    %c6_371 = arith.constant 6 : index
    %c0_372 = arith.constant 0 : index
    %c0_373 = arith.constant 0 : index
    %642 = vector.load %arg6[%c0_370, %c6_371, %c0_372, %c0_373] : memref<1x8x16x16xf32, #tpu.memory_space<vmem>>, vector<1x1x16x16xf32>
    %643 = vector.shape_cast %642 : vector<1x1x16x16xf32> to vector<16x16xf32>
    %644 = vector.shape_cast %641 : vector<16x16xf32> to vector<1x1x16x16xf32>
    tpu.vector_store %arg6[%c0_370, %c6_371, %c0_372, %c0_373], %644 {strides = array<i32>} : memref<1x8x16x16xf32, #tpu.memory_space<vmem>>, vector<1x1x16x16xf32>,
    %c28_374 = arith.constant 28 : index
    %645 = memref.load %arg5[%c28_374] : memref<32xf32, #tpu.memory_space<smem>>
    %646 = vector.broadcast %645 : f32 to vector<16x16xf32>
    %647 = arith.mulf %359, %646 : vector<16x16xf32>
    %c29_375 = arith.constant 29 : index
    %648 = memref.load %arg5[%c29_375] : memref<32xf32, #tpu.memory_space<smem>>
    %649 = vector.broadcast %648 : f32 to vector<16x16xf32>
    %650 = arith.mulf %412, %649 : vector<16x16xf32>
    %651 = arith.addf %647, %650 : vector<16x16xf32>
    %c30_376 = arith.constant 30 : index
    %652 = memref.load %arg5[%c30_376] : memref<32xf32, #tpu.memory_space<smem>>
    %653 = vector.broadcast %652 : f32 to vector<16x16xf32>
    %654 = arith.mulf %465, %653 : vector<16x16xf32>
    %655 = arith.addf %651, %654 : vector<16x16xf32>
    %c31_377 = arith.constant 31 : index
    %656 = memref.load %arg5[%c31_377] : memref<32xf32, #tpu.memory_space<smem>>
    %657 = vector.broadcast %656 : f32 to vector<16x16xf32>
    %658 = arith.mulf %518, %657 : vector<16x16xf32>
    %659 = arith.addf %655, %658 : vector<16x16xf32>
    %c0_378 = arith.constant 0 : index
    %c7_379 = arith.constant 7 : index
    %c0_380 = arith.constant 0 : index
    %c0_381 = arith.constant 0 : index
    %660 = vector.load %arg6[%c0_378, %c7_379, %c0_380, %c0_381] : memref<1x8x16x16xf32, #tpu.memory_space<vmem>>, vector<1x1x16x16xf32>
    %661 = vector.shape_cast %660 : vector<1x1x16x16xf32> to vector<16x16xf32>
    %662 = vector.shape_cast %659 : vector<16x16xf32> to vector<1x1x16x16xf32>
    tpu.vector_store %arg6[%c0_378, %c7_379, %c0_380, %c0_381], %662 {strides = array<i32>} : memref<1x8x16x16xf32, #tpu.memory_space<vmem>>, vector<1x1x16x16xf32>,
    return
  }
  func.func @transform_0(%arg0: i32) -> (i32, i32, i32, i32) {
    %c0_i32 = arith.constant 0 : i32
    %c0_i32_0 = arith.constant 0 : i32
    %c0_i32_1 = arith.constant 0 : i32
    %c0_i32_2 = arith.constant 0 : i32
    return %arg0, %c0_i32, %c0_i32_0, %c0_i32_1 : i32, i32, i32, i32
  }
  func.func @transform_1(%arg0: i32) -> i32 {
    %c0_i32 = arith.constant 0 : i32
    %c0_i32_0 = arith.constant 0 : i32
    return %c0_i32 : i32
  }
  func.func @transform_2(%arg0: i32) -> i32 {
    %c0_i32 = arith.constant 0 : i32
    %c0_i32_0 = arith.constant 0 : i32
    return %c0_i32 : i32
  }
  func.func @transform_3(%arg0: i32) -> i32 {
    %c0_i32 = arith.constant 0 : i32
    %c0_i32_0 = arith.constant 0 : i32
    return %c0_i32 : i32
  }
  func.func @transform_4(%arg0: i32) -> i32 {
    %c0_i32 = arith.constant 0 : i32
    %c0_i32_0 = arith.constant 0 : i32
    return %c0_i32 : i32
  }
  func.func @transform_5(%arg0: i32) -> (i32, i32, i32, i32) {
    %c0_i32 = arith.constant 0 : i32
    %c0_i32_0 = arith.constant 0 : i32
    %c0_i32_1 = arith.constant 0 : i32
    %c0_i32_2 = arith.constant 0 : i32
    return %arg0, %c0_i32, %c0_i32_0, %c0_i32_1 : i32, i32, i32, i32
  }
}

</mosaic_0001>

<llo_original>
// kernel: tpu_custom_call.1
$region0: #{tpu_custom_call.1}
  #allocation0 [shape = 'u32[]', space=smem, size = 0x4, offset = 0x4, fixed_abs, tag = 'smem constant byte address 0x4 - core index']
  #allocation1 [shape = 'u32[144,128]{1,0:T(1,128)}', space=vmem, size = 0x12000, scoped, tag = 'internal scratch']
  #allocation2 [shape = 'f32[4,18,18]{2,1,0:T(8,128)}', space=vmem, size = 0xc000, scoped, tag = 'scratch operand']
  #allocation3 [shape = 'f32[4,18,18]{2,1,0:T(8,128)}', space=vmem, size = 0xc000, scoped, tag = 'scratch operand']
  %s0 = inlined_call_operand.hbm [shape: f32[2,4,16,16], index: 0, kind: input, shape index: {}]
  %s1 = inlined_call_operand.vmem [shape: f32[36], index: 1, kind: input, shape index: {}]
  %s2 = inlined_call_operand.vmem [shape: f32[16], index: 2, kind: input, shape index: {}]
  %s3 = inlined_call_operand.vmem [shape: f32[36], index: 3, kind: input, shape index: {}]
  %s4 = inlined_call_operand.vmem [shape: f32[32], index: 4, kind: input, shape index: {}]
  %s5 = inlined_call_operand.hbm [shape: f32[2,8,16,16], index: 5, kind: output, shape index: {}]
  %s6 = sld [smem:[#allocation0]]
  $region73: #{tpu_custom_call.1} parent=0
    _
  %s8 = ssub.s32 1, %s6
  %s9 = scalar_select 0, %s8, %s6
  $region1: #{tpu_custom_call.1} parent=0
    #allocation4 [shape = 'u8[65536]{0}', space=vmem, size = 0x10000, scoped, tag = 'input window, operand 0']
    #allocation5 [shape = 's32[2]{0}', space=sflag, size = 0x8, scoped, tag = 'scoped memory for tpu_custom_call.1']
    #allocation6 [shape = 's32[2]{0}', space=sflag, size = 0x8, scoped, tag = 'scoped memory for tpu_custom_call.1']
    #allocation7 [shape = 's32[2]{0}', space=sflag, size = 0x8, scoped, tag = 'scoped memory for tpu_custom_call.1']
    #allocation8 [shape = 'u8[512]{0}', space=smem, size = 0x200, scoped, tag = 'input window, operand 1, single buffered']
    #allocation9 [shape = 'u8[512]{0}', space=smem, size = 0x200, scoped, tag = 'input window, operand 2, single buffered']
    #allocation10 [shape = 's32[1]{0}', space=sflag, size = 0x4, scoped, tag = 'scoped memory for tpu_custom_call.1']
    #allocation11 [shape = 'u8[512]{0}', space=smem, size = 0x200, scoped, tag = 'input window, operand 3, single buffered']
    #allocation12 [shape = 'u8[512]{0}', space=smem, size = 0x200, scoped, tag = 'input window, operand 4, single buffered']
    #allocation13 [shape = 's32[1]{0}', space=sflag, size = 0x4, scoped, tag = 'scoped memory for tpu_custom_call.1']
    #allocation14 [shape = 'u8[131072]{0}', space=vmem, size = 0x20000, scoped, tag = 'output window, operand 0']
    %10 = vsyncpa [#allocation5], 0
    %s11 = scalar_lea.sflag [#allocation5], 1
    %12 = vsyncpa %s11, 0
    %13 = vsyncpa [#allocation7], 0
    %14 = vsyncpa [#allocation10], 0
    %15 = vsyncpa [#allocation13], 0
    %16 = vsyncpa [#allocation6], 0
    %s17 = scalar_lea.sflag [#allocation6], 1
    %18 = vsyncpa %s17, 0
    loop: start=0, step=1, limit=4
    $region2: #{tpu_custom_call.1} parent=1 // loop_pre_header
      _
    $region3: #{tpu_custom_call.1} parent=1 // loop_header
      %s20 = sphi 0, %s24
      %p21 = scmp.ge.s32.totalorder %s20, 4
      %s30 = sphi 0, %s32
      %s33 = sphi 0, %s30
      %s34 = sphi 0, %s33
      %s50 = sphi 0, %s34
      %s54 = sphi 0, %s54
      %s56 = sphi 0, %s54
      %s57 = sphi 0, %s56
      %s71 = sphi 0, %s57
      %s75 = sphi 0, %s75
      %s77 = sphi 0, %s75
      %s78 = sphi 0, %s77
      %s92 = sphi 0, %s78
      %s96 = sphi 0, %s96
      %s98 = sphi 0, %s96
      %s99 = sphi 0, %s98
      %s113 = sphi 0, %s99
      %s117 = sphi 0, %s117
      %s119 = sphi 0, %s117
      %s120 = sphi 0, %s119
      %s134 = sphi 0, %s120
      %s140 = sphi 0, %s142
      %s143 = sphi 0, %s140
      %s144 = sphi 0, %s143
      %s160 = sphi 0, %s144
    $region4: #{tpu_custom_call.1} parent=1 // loop_header_branch
      %23 = sbr.rel (%p21) target = $region8
    $region5: #{tpu_custom_call.1} parent=1 // loop_body
      %s25 = ssub.s32 %s20, 1
      %s26 = ssub.s32 %s20, 2
      %s27 = sadd.s32 %s20, 1
      %s28 = ssub.s32 %s20, %s27
      %p29 = scmp.eq.s32.totalorder %s28, 0
      %s31 = sadd.s32 %s30, 1
      %s32 = scalar_select %p29, %s30, %s31
      %p35 = pneg %p29
      %p36 = scmp.eq.s32.totalorder %s20, 1
      %p37 = por %p35, %p36
      %p38 = scmp.ne.s32.totalorder %s30, %s33
      %p39 = scmp.eq.s32.totalorder %s20, 0
      %p40 = por %p38, %p39
      %p41 = scmp.ne.s32.totalorder %s30, %s33
      %p42 = scmp.eq.s32.totalorder %s25, 1
      %p43 = por %p41, %p42
      %p44 = scmp.ne.s32.totalorder %s33, %s34
      %p45 = scmp.eq.s32.totalorder %s25, 0
      %p46 = por %p44, %p45
      %p47 = scmp.ne.s32.totalorder %s33, %s34
      %p48 = scmp.eq.s32.totalorder %s26, 1
      %p49 = por %p47, %p48
      %p51 = scmp.ne.s32.totalorder %s34, %s50
      %p52 = scmp.eq.s32.totalorder %s26, 0
      %p53 = por %p51, %p52
      %s55 = sadd.s32 %s54, 1
      %p58 = scmp.eq.s32.totalorder %s20, 1
      %p59 = scmp.ne.s32.totalorder %s54, %s56
      %p60 = scmp.eq.s32.totalorder %s20, 0
      %p61 = por %p59, %p60
      %p62 = scmp.ne.s32.totalorder %s54, %s56
      %p63 = scmp.eq.s32.totalorder %s25, 1
      %p64 = por %p62, %p63
      %p65 = scmp.ne.s32.totalorder %s56, %s57
      %p66 = scmp.eq.s32.totalorder %s25, 0
      %p67 = por %p65, %p66
      %p68 = scmp.ne.s32.totalorder %s56, %s57
      %p69 = scmp.eq.s32.totalorder %s26, 1
      %p70 = por %p68, %p69
      %p72 = scmp.ne.s32.totalorder %s57, %s71
      %p73 = scmp.eq.s32.totalorder %s26, 0
      %p74 = por %p72, %p73
      %s76 = sadd.s32 %s75, 1
      %p79 = scmp.eq.s32.totalorder %s20, 1
      %p80 = scmp.ne.s32.totalorder %s75, %s77
      %p81 = scmp.eq.s32.totalorder %s20, 0
      %p82 = por %p80, %p81
      %p83 = scmp.ne.s32.totalorder %s75, %s77
      %p84 = scmp.eq.s32.totalorder %s25, 1
      %p85 = por %p83, %p84
      %p86 = scmp.ne.s32.totalorder %s77, %s78
      %p87 = scmp.eq.s32.totalorder %s25, 0
      %p88 = por %p86, %p87
      %p89 = scmp.ne.s32.totalorder %s77, %s78
      %p90 = scmp.eq.s32.totalorder %s26, 1
      %p91 = por %p89, %p90
      %p93 = scmp.ne.s32.totalorder %s78, %s92
      %p94 = scmp.eq.s32.totalorder %s26, 0
      %p95 = por %p93, %p94
      %s97 = sadd.s32 %s96, 1
      %p100 = scmp.eq.s32.totalorder %s20, 1
      %p101 = scmp.ne.s32.totalorder %s96, %s98
      %p102 = scmp.eq.s32.totalorder %s20, 0
      %p103 = por %p101, %p102
      %p104 = scmp.ne.s32.totalorder %s96, %s98
      %p105 = scmp.eq.s32.totalorder %s25, 1
      %p106 = por %p104, %p105
      %p107 = scmp.ne.s32.totalorder %s98, %s99
      %p108 = scmp.eq.s32.totalorder %s25, 0
      %p109 = por %p107, %p108
      %p110 = scmp.ne.s32.totalorder %s98, %s99
      %p111 = scmp.eq.s32.totalorder %s26, 1
      %p112 = por %p110, %p111
      %p114 = scmp.ne.s32.totalorder %s99, %s113
      %p115 = scmp.eq.s32.totalorder %s26, 0
      %p116 = por %p114, %p115
      %s118 = sadd.s32 %s117, 1
      %p121 = scmp.eq.s32.totalorder %s20, 1
      %p122 = scmp.ne.s32.totalorder %s117, %s119
      %p123 = scmp.eq.s32.totalorder %s20, 0
      %p124 = por %p122, %p123
      %p125 = scmp.ne.s32.totalorder %s117, %s119
      %p126 = scmp.eq.s32.totalorder %s25, 1
      %p127 = por %p125, %p126
      %p128 = scmp.ne.s32.totalorder %s119, %s120
      %p129 = scmp.eq.s32.totalorder %s25, 0
      %p130 = por %p128, %p129
      %p131 = scmp.ne.s32.totalorder %s119, %s120
      %p132 = scmp.eq.s32.totalorder %s26, 1
      %p133 = por %p131, %p132
      %p135 = scmp.ne.s32.totalorder %s120, %s134
      %p136 = scmp.eq.s32.totalorder %s26, 0
      %p137 = por %p135, %p136
      %s138 = ssub.s32 %s20, %s27
      %p139 = scmp.eq.s32.totalorder %s138, 0
      %s141 = sadd.s32 %s140, 1
      %s142 = scalar_select %p139, %s140, %s141
      %p145 = pneg %p139
      %p146 = scmp.eq.s32.totalorder %s20, 1
      %p147 = por %p145, %p146
      %p148 = scmp.ne.s32.totalorder %s140, %s143
      %p149 = scmp.eq.s32.totalorder %s20, 0
      %p150 = por %p148, %p149
      %p151 = scmp.ne.s32.totalorder %s140, %s143
      %p152 = scmp.eq.s32.totalorder %s25, 1
      %p153 = por %p151, %p152
      %p154 = scmp.ne.s32.totalorder %s143, %s144
      %p155 = scmp.eq.s32.totalorder %s25, 0
      %p156 = por %p154, %p155
      %p157 = scmp.ne.s32.totalorder %s143, %s144
      %p158 = scmp.eq.s32.totalorder %s26, 1
      %p159 = por %p157, %p158
      %p161 = scmp.ne.s32.totalorder %s144, %s160
      %p162 = scmp.eq.s32.totalorder %s26, 0
      %p163 = por %p161, %p162
      %p164 = scmp.le.s32.totalorder 1, %s20
      %p165 = scmp.lt.s32.totalorder %s20, 3
      %p166 = pnand %p164, %p165
      %p167 = pneg %p166
      // Predicated region
      $region9: #{tpu_custom_call.1} parent=5 // pred_check
        _
      $region10: #{tpu_custom_call.1} parent=5 // pred_check_branch
        %169 = sbr.rel (%p166) target = $region12
      $region11: #{tpu_custom_call.1} parent=5 // pred_region
        %s170 = ssub.s32 %s20, 1
        // Predicated region
        $region13: #{tpu_custom_call.1} parent=11 // pred_check
          %p171 = pneg %p67
        $region14: #{tpu_custom_call.1} parent=11 // pred_check_branch
          %173 = sbr.rel (%p171) target = $region16
        $region15: #{tpu_custom_call.1} parent=11 // pred_region
          %s175 = ssub.s32 16, 16
          %176 = vsyncadd [#allocation7], %s175
          %s178 = sshll.u32 %s1, 4
          %s179 = int_to_ptr.vmem [resolvable:$true] %s178
          %181 = dma.vmem_to_smem %s179, 16, [#allocation8], [#allocation7]
        $region16: #{tpu_custom_call.1} parent=11 // pred_fallthru
          _
        // Predicated region
        $region17: #{tpu_custom_call.1} parent=11 // pred_check
          %p182 = pneg %p88
        $region18: #{tpu_custom_call.1} parent=11 // pred_check_branch
          %184 = sbr.rel (%p182) target = $region20
        $region19: #{tpu_custom_call.1} parent=11 // pred_region
          %s186 = ssub.s32 16, 16
          %187 = vsyncadd [#allocation10], %s186
          %s189 = sshll.u32 %s2, 4
          %s190 = int_to_ptr.vmem [resolvable:$true] %s189
          %192 = dma.vmem_to_smem %s190, 16, [#allocation9], [#allocation10]
        $region20: #{tpu_custom_call.1} parent=11 // pred_fallthru
          _
        // Predicated region
        $region21: #{tpu_custom_call.1} parent=11 // pred_check
          %p193 = pneg %p109
        $region22: #{tpu_custom_call.1} parent=11 // pred_check_branch
          %195 = sbr.rel (%p193) target = $region24
        $region23: #{tpu_custom_call.1} parent=11 // pred_region
          %s197 = ssub.s32 16, 16
          %198 = vsyncadd [#allocation10], %s197
          %s200 = sshll.u32 %s3, 4
          %s201 = int_to_ptr.vmem [resolvable:$true] %s200
          %203 = dma.vmem_to_smem %s201, 16, [#allocation11], [#allocation10]
        $region24: #{tpu_custom_call.1} parent=11 // pred_fallthru
          _
        // Predicated region
        $region25: #{tpu_custom_call.1} parent=11 // pred_check
          %p204 = pneg %p130
        $region26: #{tpu_custom_call.1} parent=11 // pred_check_branch
          %206 = sbr.rel (%p204) target = $region28
        $region27: #{tpu_custom_call.1} parent=11 // pred_region
          %s208 = ssub.s32 16, 16
          %209 = vsyncadd [#allocation13], %s208
          %s211 = sshll.u32 %s4, 4
          %s212 = int_to_ptr.vmem [resolvable:$true] %s211
          %214 = dma.vmem_to_smem %s212, 16, [#allocation12], [#allocation13]
        $region28: #{tpu_custom_call.1} parent=11 // pred_fallthru
          _
      $region12: #{tpu_custom_call.1} parent=5 // pred_fallthru
        _
      %p215 = scmp.lt.s32.totalorder %s20, 2
      // Predicated region
      $region29: #{tpu_custom_call.1} parent=5 // pred_check
        %p216 = pneg %p215
      $region30: #{tpu_custom_call.1} parent=5 // pred_check_branch
        %218 = sbr.rel (%p216) target = $region32
      $region31: #{tpu_custom_call.1} parent=5 // pred_region
        // Predicated region
        $region33: #{tpu_custom_call.1} parent=31 // pred_check
          %p219 = pneg %p40
        $region34: #{tpu_custom_call.1} parent=31 // pred_check_branch
          %221 = sbr.rel (%p219) target = $region36
        $region35: #{tpu_custom_call.1} parent=31 // pred_region
          %s222 = sand.u32 %s30, 1
          %s223 = scalar_lea.sflag [#allocation5], %s222
          %s224 = sand.u32 %s30, 1
          %s225 = smul.addr %s224, 64
          %s226 = scalar_lea.vmem [#allocation4], %s225
          %s228 = ssub.s32 1024, 1024
          %229 = vsyncadd %s223, %s228
          %s230 = smul.addr %s20, 8
          %s231 = smul.addr %s230, 128
          %s232 = scalar_lea.hbm %s0, %s231
          %s233 = sshll.u32 %s226, 4
          %s234 = int_to_ptr.vmem [resolvable:$true] %s233
          %239 = dma.hbm_to_vmem [thread:$0]  %s232, 1024, %s234, %s223, 128, 128, 8
        $region36: #{tpu_custom_call.1} parent=31 // pred_fallthru
          _
      $region32: #{tpu_custom_call.1} parent=5 // pred_fallthru
        _
      %p240 = scmp.le.s32.totalorder 1, %s20
      %p241 = scmp.lt.s32.totalorder %s20, 3
      %p242 = pnand %p240, %p241
      %p243 = pneg %p242
      // Predicated region
      $region37: #{tpu_custom_call.1} parent=5 // pred_check
        _
      $region38: #{tpu_custom_call.1} parent=5 // pred_check_branch
        %245 = sbr.rel (%p242) target = $region40
      $region39: #{tpu_custom_call.1} parent=5 // pred_region
        %s246 = ssub.s32 %s20, 1
        %s247 = sand.u32 %s33, 1
        %s248 = scalar_lea.sflag [#allocation5], %s247
        %s249 = sand.u32 %s33, 1
        %s250 = smul.addr %s249, 64
        %s251 = scalar_lea.vmem [#allocation4], %s250
        // Predicated region
        $region41: #{tpu_custom_call.1} parent=39 // pred_check
          %p252 = pneg %p46
        $region42: #{tpu_custom_call.1} parent=39 // pred_check_branch
          %254 = sbr.rel (%p252) target = $region44
        $region43: #{tpu_custom_call.1} parent=39 // pred_region
          %255 = dma.done %s248, 1024
        $region44: #{tpu_custom_call.1} parent=39 // pred_fallthru
          _
        // Predicated region
        $region45: #{tpu_custom_call.1} parent=39 // pred_check
          %p256 = pneg %p67
        $region46: #{tpu_custom_call.1} parent=39 // pred_check_branch
          %258 = sbr.rel (%p256) target = $region48
        $region47: #{tpu_custom_call.1} parent=39 // pred_region
          %259 = dma.done [#allocation7], 16
        $region48: #{tpu_custom_call.1} parent=39 // pred_fallthru
          _
        // Predicated region
        $region49: #{tpu_custom_call.1} parent=39 // pred_check
          %p260 = pneg %p88
        $region50: #{tpu_custom_call.1} parent=39 // pred_check_branch
          %262 = sbr.rel (%p260) target = $region52
        $region51: #{tpu_custom_call.1} parent=39 // pred_region
          %263 = dma.done [#allocation10], 16
        $region52: #{tpu_custom_call.1} parent=39 // pred_fallthru
          _
        // Predicated region
        $region53: #{tpu_custom_call.1} parent=39 // pred_check
          %p264 = pneg %p109
        $region54: #{tpu_custom_call.1} parent=39 // pred_check_branch
          %266 = sbr.rel (%p264) target = $region56
        $region55: #{tpu_custom_call.1} parent=39 // pred_region
          %267 = dma.done [#allocation10], 16
        $region56: #{tpu_custom_call.1} parent=39 // pred_fallthru
          _
        // Predicated region
        $region57: #{tpu_custom_call.1} parent=39 // pred_check
          %p268 = pneg %p130
        $region58: #{tpu_custom_call.1} parent=39 // pred_check_branch
          %270 = sbr.rel (%p268) target = $region60
        $region59: #{tpu_custom_call.1} parent=39 // pred_region
          %271 = dma.done [#allocation13], 16
        $region60: #{tpu_custom_call.1} parent=39 // pred_fallthru
          _
        %272 = sfence
        %s273 = sand.u32 %s33, 1
        %s274 = scalar_lea.sflag [#allocation5], %s273
        %s275 = sand.u32 %s33, 1
        %s276 = smul.addr %s275, 64
        %s277 = scalar_lea.vmem [#allocation4], %s276
        %p278 = pneg %p46
        %p279 = pneg %p43
        %p280 = pneg %p67
        %p281 = pneg %p64
        %p282 = pneg %p88
        %p283 = pneg %p85
        %p284 = pneg %p109
        %p285 = pneg %p106
        %p286 = pneg %p130
        %p287 = pneg %p127
        %p288 = pneg %p156
        %p289 = pneg %p153
        %s290 = sand.u32 %s143, 1
        %s291 = scalar_lea.sflag [#allocation6], %s290
        %s292 = sand.u32 %s143, 1
        %s293 = smul.addr %s292, 128
        %s294 = scalar_lea.vmem [#allocation14], %s293
        %vm295 = vcmask 139264
        %296 = vst.msk [vmem:[#allocation2] sm:$0x1] %vm295, 0.0
        %297 = vst.msk [vmem:[#allocation2 + $0x18] sm:$0x1] %vm295, 0.0
        %298 = vst.msk [vmem:[#allocation2 + $0x30] sm:$0x1] %vm295, 0.0
        %299 = vst.msk [vmem:[#allocation2 + $0x48] sm:$0x1] %vm295, 0.0
        %300 = vst.msk [vmem:[#allocation2 + $0x11] sm:$0x1] %vm295, 0.0
        %301 = vst.msk [vmem:[#allocation2 + $0x29] sm:$0x1] %vm295, 0.0
        %302 = vst.msk [vmem:[#allocation2 + $0x41] sm:$0x1] %vm295, 0.0
        %303 = vst.msk [vmem:[#allocation2 + $0x59] sm:$0x1] %vm295, 0.0
        %vm304 = vcmask 7168
        %305 = vst.msk [vmem:[#allocation2] sm:$0xff] %vm304, 0.0
        %306 = vst.msk [vmem:[#allocation2 + $0x8] sm:$0xff] %vm304, 0.0
        %vm307 = vcmask 1024
        %308 = vst.msk [vmem:[#allocation2 + $0x10] sm:$0x3] %vm307, 0.0
        %309 = vst.msk [vmem:[#allocation2 + $0x18] sm:$0xff] %vm304, 0.0
        %310 = vst.msk [vmem:[#allocation2 + $0x20] sm:$0xff] %vm304, 0.0
        %311 = vst.msk [vmem:[#allocation2 + $0x28] sm:$0x3] %vm307, 0.0
        %312 = vst.msk [vmem:[#allocation2 + $0x30] sm:$0xff] %vm304, 0.0
        %313 = vst.msk [vmem:[#allocation2 + $0x38] sm:$0xff] %vm304, 0.0
        %314 = vst.msk [vmem:[#allocation2 + $0x40] sm:$0x3] %vm307, 0.0
        %315 = vst.msk [vmem:[#allocation2 + $0x48] sm:$0xff] %vm304, 0.0
        %316 = vst.msk [vmem:[#allocation2 + $0x50] sm:$0xff] %vm304, 0.0
        %317 = vst.msk [vmem:[#allocation2 + $0x58] sm:$0x3] %vm307, 0.0
        %vm318 = vcmask 146568
        %319 = vst.msk [vmem:[#allocation2] sm:$0xff] %vm318, 0.0
        %320 = vst.msk [vmem:[#allocation2 + $0x8] sm:$0xff] %vm318, 0.0
        %vm321 = vcmask 140424
        %322 = vst.msk [vmem:[#allocation2 + $0x10] sm:$0x3] %vm321, 0.0
        %323 = vst.msk [vmem:[#allocation2 + $0x18] sm:$0xff] %vm318, 0.0
        %324 = vst.msk [vmem:[#allocation2 + $0x20] sm:$0xff] %vm318, 0.0
        %325 = vst.msk [vmem:[#allocation2 + $0x28] sm:$0x3] %vm321, 0.0
        %326 = vst.msk [vmem:[#allocation2 + $0x30] sm:$0xff] %vm318, 0.0
        %327 = vst.msk [vmem:[#allocation2 + $0x38] sm:$0xff] %vm318, 0.0
        %328 = vst.msk [vmem:[#allocation2 + $0x40] sm:$0x3] %vm321, 0.0
        %329 = vst.msk [vmem:[#allocation2 + $0x48] sm:$0xff] %vm318, 0.0
        %330 = vst.msk [vmem:[#allocation2 + $0x50] sm:$0xff] %vm318, 0.0
        %331 = vst.msk [vmem:[#allocation2 + $0x58] sm:$0x3] %vm321, 0.0
        %332 = vst.msk [vmem:[#allocation3] sm:$0x1] %vm295, 0.0
        %333 = vst.msk [vmem:[#allocation3 + $0x18] sm:$0x1] %vm295, 0.0
        %334 = vst.msk [vmem:[#allocation3 + $0x30] sm:$0x1] %vm295, 0.0
        %335 = vst.msk [vmem:[#allocation3 + $0x48] sm:$0x1] %vm295, 0.0
        %336 = vst.msk [vmem:[#allocation3 + $0x11] sm:$0x1] %vm295, 0.0
        %337 = vst.msk [vmem:[#allocation3 + $0x29] sm:$0x1] %vm295, 0.0
        %338 = vst.msk [vmem:[#allocation3 + $0x41] sm:$0x1] %vm295, 0.0
        %339 = vst.msk [vmem:[#allocation3 + $0x59] sm:$0x1] %vm295, 0.0
        %340 = vst.msk [vmem:[#allocation3] sm:$0xff] %vm304, 0.0
        %341 = vst.msk [vmem:[#allocation3 + $0x8] sm:$0xff] %vm304, 0.0
        %342 = vst.msk [vmem:[#allocation3 + $0x10] sm:$0x3] %vm307, 0.0
        %343 = vst.msk [vmem:[#allocation3 + $0x18] sm:$0xff] %vm304, 0.0
        %344 = vst.msk [vmem:[#allocation3 + $0x20] sm:$0xff] %vm304, 0.0
        %345 = vst.msk [vmem:[#allocation3 + $0x28] sm:$0x3] %vm307, 0.0
        %346 = vst.msk [vmem:[#allocation3 + $0x30] sm:$0xff] %vm304, 0.0
        %347 = vst.msk [vmem:[#allocation3 + $0x38] sm:$0xff] %vm304, 0.0
        %348 = vst.msk [vmem:[#allocation3 + $0x40] sm:$0x3] %vm307, 0.0
        %349 = vst.msk [vmem:[#allocation3 + $0x48] sm:$0xff] %vm304, 0.0
        %350 = vst.msk [vmem:[#allocation3 + $0x50] sm:$0xff] %vm304, 0.0
        %351 = vst.msk [vmem:[#allocation3 + $0x58] sm:$0x3] %vm307, 0.0
        %352 = vst.msk [vmem:[#allocation3] sm:$0xff] %vm318, 0.0
        %353 = vst.msk [vmem:[#allocation3 + $0x8] sm:$0xff] %vm318, 0.0
        %354 = vst.msk [vmem:[#allocation3 + $0x10] sm:$0x3] %vm321, 0.0
        %355 = vst.msk [vmem:[#allocation3 + $0x18] sm:$0xff] %vm318, 0.0
        %356 = vst.msk [vmem:[#allocation3 + $0x20] sm:$0xff] %vm318, 0.0
        %357 = vst.msk [vmem:[#allocation3 + $0x28] sm:$0x3] %vm321, 0.0
        %358 = vst.msk [vmem:[#allocation3 + $0x30] sm:$0xff] %vm318, 0.0
        %359 = vst.msk [vmem:[#allocation3 + $0x38] sm:$0xff] %vm318, 0.0
        %360 = vst.msk [vmem:[#allocation3 + $0x40] sm:$0x3] %vm321, 0.0
        %361 = vst.msk [vmem:[#allocation3 + $0x48] sm:$0xff] %vm318, 0.0
        %362 = vst.msk [vmem:[#allocation3 + $0x50] sm:$0xff] %vm318, 0.0
        %363 = vst.msk [vmem:[#allocation3 + $0x58] sm:$0x3] %vm321, 0.0
        %v364 = vld [vmem:[%s251] sm:$0xff]
        %v365 = vld [vmem:[%s251 + $0x8] sm:$0xff]
        %v366 = vld [vmem:[%s251 + $0x10] sm:$0xff]
        %v367 = vld [vmem:[%s251 + $0x18] sm:$0xff]
        %v368 = vld [vmem:[%s251 + $0x20] sm:$0xff]
        %v369 = vld [vmem:[%s251 + $0x28] sm:$0xff]
        %v370 = vld [vmem:[%s251 + $0x30] sm:$0xff]
        %v371 = vld [vmem:[%s251 + $0x38] sm:$0xff]
        %380 = vrot.lane.b32.xlu0 %v364, 1
        %v381 = vpop.permute.xlu0 %380
        %382 = vrot.lane.b32.xlu0 %v365, 1
        %v383 = vpop.permute.xlu0 %382
        %384 = vrot.lane.b32.xlu0 %v366, 1
        %v385 = vpop.permute.xlu0 %384
        %386 = vrot.lane.b32.xlu0 %v367, 1
        %v387 = vpop.permute.xlu0 %386
        %388 = vrot.lane.b32.xlu0 %v368, 1
        %v389 = vpop.permute.xlu0 %388
        %390 = vrot.lane.b32.xlu0 %v369, 1
        %v391 = vpop.permute.xlu0 %390
        %392 = vrot.lane.b32.xlu0 %v370, 1
        %v393 = vpop.permute.xlu0 %392
        %394 = vrot.lane.b32.xlu0 %v371, 1
        %v395 = vpop.permute.xlu0 %394
        %vm404 = vcmask 138248
        %405 = vst.msk [vmem:[#allocation2 + $0x1] sm:$0xff] %vm404, %v381
        %406 = vst.msk [vmem:[#allocation2 + $0x9] sm:$0xff] %vm404, %v383
        %407 = vst.msk [vmem:[#allocation2 + $0x19] sm:$0xff] %vm404, %v385
        %408 = vst.msk [vmem:[#allocation2 + $0x21] sm:$0xff] %vm404, %v387
        %409 = vst.msk [vmem:[#allocation2 + $0x31] sm:$0xff] %vm404, %v389
        %410 = vst.msk [vmem:[#allocation2 + $0x39] sm:$0xff] %vm404, %v391
        %411 = vst.msk [vmem:[#allocation2 + $0x49] sm:$0xff] %vm404, %v393
        %412 = vst.msk [vmem:[#allocation2 + $0x51] sm:$0xff] %vm404, %v395
        %s413 = sld [smem:[#allocation8]]
        %v414 = vld [vmem:[#allocation2] sm:$0xff]
        %v415 = vld [vmem:[#allocation2 + $0x8] sm:$0xff]
        %v416 = vstv %s413
        %v417 = vmul.f32 %v414, %v416
        %v418 = vmul.f32 %v415, %v416
        %s419 = sld [smem:[#allocation8 + $0x1]]
        %v420 = vstv %s419
        %v421 = vmul.f32 %v414, %v420
        %v422 = vmul.f32 %v415, %v420
        %425 = vrot.lane.b32.xlu0 %v421, 127
        %v426 = vpop.permute.xlu0 %425
        %427 = vrot.lane.b32.xlu0 %v422, 127
        %v428 = vpop.permute.xlu0 %427
        %v431 = vadd.f32 %v417, %v426
        %v432 = vadd.f32 %v418, %v428
        %s433 = sld [smem:[#allocation8 + $0x2]]
        %v434 = vstv %s433
        %v435 = vmul.f32 %v414, %v434
        %v436 = vmul.f32 %v415, %v434
        %439 = vrot.lane.b32.xlu0 %v435, 126
        %v440 = vpop.permute.xlu0 %439
        %441 = vrot.lane.b32.xlu0 %v436, 126
        %v442 = vpop.permute.xlu0 %441
        %v445 = vadd.f32 %v431, %v440
        %v446 = vadd.f32 %v432, %v442
        %s447 = sld [smem:[#allocation8 + $0x3]]
        %v448 = vld [vmem:[#allocation2 + $0x1] sm:$0xff]
        %v449 = vld [vmem:[#allocation2 + $0x9] sm:$0xff]
        %v450 = vstv %s447
        %v451 = vmul.f32 %v448, %v450
        %v452 = vmul.f32 %v449, %v450
        %v453 = vadd.f32 %v445, %v451
        %v454 = vadd.f32 %v446, %v452
        %s455 = sld [smem:[#allocation8 + $0x4]]
        %v456 = vstv %s455
        %v457 = vmul.f32 %v448, %v456
        %v458 = vmul.f32 %v449, %v456
        %461 = vrot.lane.b32.xlu0 %v457, 127
        %v462 = vpop.permute.xlu0 %461
        %463 = vrot.lane.b32.xlu0 %v458, 127
        %v464 = vpop.permute.xlu0 %463
        %v467 = vadd.f32 %v453, %v462
        %v468 = vadd.f32 %v454, %v464
        %s469 = sld [smem:[#allocation8 + $0x5]]
        %v470 = vstv %s469
        %v471 = vmul.f32 %v448, %v470
        %v472 = vmul.f32 %v449, %v470
        %475 = vrot.lane.b32.xlu0 %v471, 126
        %v476 = vpop.permute.xlu0 %475
        %477 = vrot.lane.b32.xlu0 %v472, 126
        %v478 = vpop.permute.xlu0 %477
        %v481 = vadd.f32 %v467, %v476
        %v482 = vadd.f32 %v468, %v478
        %s483 = sld [smem:[#allocation8 + $0x6]]
        %v484 = vld [vmem:[#allocation2 + $0x2] sm:$0xff]
        %v485 = vld [vmem:[#allocation2 + $0xa] sm:$0xff]
        %v486 = vstv %s483
        %v487 = vmul.f32 %v484, %v486
        %v488 = vmul.f32 %v485, %v486
        %v489 = vadd.f32 %v481, %v487
        %v490 = vadd.f32 %v482, %v488
        %s491 = sld [smem:[#allocation8 + $0x7]]
        %v492 = vstv %s491
        %v493 = vmul.f32 %v484, %v492
        %v494 = vmul.f32 %v485, %v492
        %497 = vrot.lane.b32.xlu0 %v493, 127
        %v498 = vpop.permute.xlu0 %497
        %499 = vrot.lane.b32.xlu0 %v494, 127
        %v500 = vpop.permute.xlu0 %499
        %v503 = vadd.f32 %v489, %v498
        %v504 = vadd.f32 %v490, %v500
        %s505 = sld [smem:[#allocation8 + $0x8]]
        %v506 = vstv %s505
        %v507 = vmul.f32 %v484, %v506
        %v508 = vmul.f32 %v485, %v506
        %511 = vrot.lane.b32.xlu0 %v507, 126
        %v512 = vpop.permute.xlu0 %511
        %513 = vrot.lane.b32.xlu0 %v508, 126
        %v514 = vpop.permute.xlu0 %513
        %v517 = vadd.f32 %v503, %v512
        %v518 = vadd.f32 %v504, %v514
        %s519 = sld [smem:[#allocation8 + $0x9]]
        %s520 = scalar_lea.vmem [#allocation2], 24
        %v521 = vld [vmem:[%s520] sm:$0xff]
        %v522 = vld [vmem:[%s520 + $0x8] sm:$0xff]
        %v523 = vstv %s519
        %v524 = vmul.f32 %v521, %v523
        %v525 = vmul.f32 %v522, %v523
        %s526 = sld [smem:[#allocation8 + $0xa]]
        %v527 = vstv %s526
        %v528 = vmul.f32 %v521, %v527
        %v529 = vmul.f32 %v522, %v527
        %532 = vrot.lane.b32.xlu0 %v528, 127
        %v533 = vpop.permute.xlu0 %532
        %534 = vrot.lane.b32.xlu0 %v529, 127
        %v535 = vpop.permute.xlu0 %534
        %v538 = vadd.f32 %v524, %v533
        %v539 = vadd.f32 %v525, %v535
        %s540 = sld [smem:[#allocation8 + $0xb]]
        %v541 = vstv %s540
        %v542 = vmul.f32 %v521, %v541
        %v543 = vmul.f32 %v522, %v541
        %546 = vrot.lane.b32.xlu0 %v542, 126
        %v547 = vpop.permute.xlu0 %546
        %548 = vrot.lane.b32.xlu0 %v543, 126
        %v549 = vpop.permute.xlu0 %548
        %v552 = vadd.f32 %v538, %v547
        %v553 = vadd.f32 %v539, %v549
        %s554 = sld [smem:[#allocation8 + $0xc]]
        %v555 = vld [vmem:[%s520 + $0x1] sm:$0xff]
        %v556 = vld [vmem:[%s520 + $0x9] sm:$0xff]
        %v557 = vstv %s554
        %v558 = vmul.f32 %v555, %v557
        %v559 = vmul.f32 %v556, %v557
        %v560 = vadd.f32 %v552, %v558
        %v561 = vadd.f32 %v553, %v559
        %s562 = sld [smem:[#allocation8 + $0xd]]
        %v563 = vstv %s562
        %v564 = vmul.f32 %v555, %v563
        %v565 = vmul.f32 %v556, %v563
        %568 = vrot.lane.b32.xlu0 %v564, 127
        %v569 = vpop.permute.xlu0 %568
        %570 = vrot.lane.b32.xlu0 %v565, 127
        %v571 = vpop.permute.xlu0 %570
        %v574 = vadd.f32 %v560, %v569
        %v575 = vadd.f32 %v561, %v571
        %s576 = sld [smem:[#allocation8 + $0xe]]
        %v577 = vstv %s576
        %v578 = vmul.f32 %v555, %v577
        %v579 = vmul.f32 %v556, %v577
        %582 = vrot.lane.b32.xlu0 %v578, 126
        %v583 = vpop.permute.xlu0 %582
        %584 = vrot.lane.b32.xlu0 %v579, 126
        %v585 = vpop.permute.xlu0 %584
        %v588 = vadd.f32 %v574, %v583
        %v589 = vadd.f32 %v575, %v585
        %s590 = sld [smem:[#allocation8 + $0xf]]
        %v591 = vld [vmem:[%s520 + $0x2] sm:$0xff]
        %v592 = vld [vmem:[%s520 + $0xa] sm:$0xff]
        %v593 = vstv %s590
        %v594 = vmul.f32 %v591, %v593
        %v595 = vmul.f32 %v592, %v593
        %v596 = vadd.f32 %v588, %v594
        %v597 = vadd.f32 %v589, %v595
        %s598 = sld [smem:[#allocation8 + $0x10]]
        %v599 = vstv %s598
        %v600 = vmul.f32 %v591, %v599
        %v601 = vmul.f32 %v592, %v599
        %604 = vrot.lane.b32.xlu0 %v600, 127
        %v605 = vpop.permute.xlu0 %604
        %606 = vrot.lane.b32.xlu0 %v601, 127
        %v607 = vpop.permute.xlu0 %606
        %v610 = vadd.f32 %v596, %v605
        %v611 = vadd.f32 %v597, %v607
        %s612 = sld [smem:[#allocation8 + $0x11]]
        %v613 = vstv %s612
        %v614 = vmul.f32 %v591, %v613
        %v615 = vmul.f32 %v592, %v613
        %618 = vrot.lane.b32.xlu0 %v614, 126
        %v619 = vpop.permute.xlu0 %618
        %620 = vrot.lane.b32.xlu0 %v615, 126
        %v621 = vpop.permute.xlu0 %620
        %v624 = vadd.f32 %v610, %v619
        %v625 = vadd.f32 %v611, %v621
        %s626 = sld [smem:[#allocation8 + $0x12]]
        %s627 = scalar_lea.vmem [#allocation2], 48
        %v628 = vld [vmem:[%s627] sm:$0xff]
        %v629 = vld [vmem:[%s627 + $0x8] sm:$0xff]
        %v630 = vstv %s626
        %v631 = vmul.f32 %v628, %v630
        %v632 = vmul.f32 %v629, %v630
        %s633 = sld [smem:[#allocation8 + $0x13]]
        %v634 = vstv %s633
        %v635 = vmul.f32 %v628, %v634
        %v636 = vmul.f32 %v629, %v634
        %639 = vrot.lane.b32.xlu0 %v635, 127
        %v640 = vpop.permute.xlu0 %639
        %641 = vrot.lane.b32.xlu0 %v636, 127
        %v642 = vpop.permute.xlu0 %641
        %v645 = vadd.f32 %v631, %v640
        %v646 = vadd.f32 %v632, %v642
        %s647 = sld [smem:[#allocation8 + $0x14]]
        %v648 = vstv %s647
        %v649 = vmul.f32 %v628, %v648
        %v650 = vmul.f32 %v629, %v648
        %653 = vrot.lane.b32.xlu0 %v649, 126
        %v654 = vpop.permute.xlu0 %653
        %655 = vrot.lane.b32.xlu0 %v650, 126
        %v656 = vpop.permute.xlu0 %655
        %v659 = vadd.f32 %v645, %v654
        %v660 = vadd.f32 %v646, %v656
        %s661 = sld [smem:[#allocation8 + $0x15]]
        %v662 = vld [vmem:[%s627 + $0x1] sm:$0xff]
        %v663 = vld [vmem:[%s627 + $0x9] sm:$0xff]
        %v664 = vstv %s661
        %v665 = vmul.f32 %v662, %v664
        %v666 = vmul.f32 %v663, %v664
        %v667 = vadd.f32 %v659, %v665
        %v668 = vadd.f32 %v660, %v666
        %s669 = sld [smem:[#allocation8 + $0x16]]
        %v670 = vstv %s669
        %v671 = vmul.f32 %v662, %v670
        %v672 = vmul.f32 %v663, %v670
        %675 = vrot.lane.b32.xlu0 %v671, 127
        %v676 = vpop.permute.xlu0 %675
        %677 = vrot.lane.b32.xlu0 %v672, 127
        %v678 = vpop.permute.xlu0 %677
        %v681 = vadd.f32 %v667, %v676
        %v682 = vadd.f32 %v668, %v678
        %s683 = sld [smem:[#allocation8 + $0x17]]
        %v684 = vstv %s683
        %v685 = vmul.f32 %v662, %v684
        %v686 = vmul.f32 %v663, %v684
        %689 = vrot.lane.b32.xlu0 %v685, 126
        %v690 = vpop.permute.xlu0 %689
        %691 = vrot.lane.b32.xlu0 %v686, 126
        %v692 = vpop.permute.xlu0 %691
        %v695 = vadd.f32 %v681, %v690
        %v696 = vadd.f32 %v682, %v692
        %s697 = sld [smem:[#allocation8 + $0x18]]
        %v698 = vld [vmem:[%s627 + $0x2] sm:$0xff]
        %v699 = vld [vmem:[%s627 + $0xa] sm:$0xff]
        %v700 = vstv %s697
        %v701 = vmul.f32 %v698, %v700
        %v702 = vmul.f32 %v699, %v700
        %v703 = vadd.f32 %v695, %v701
        %v704 = vadd.f32 %v696, %v702
        %s705 = sld [smem:[#allocation8 + $0x19]]
        %v706 = vstv %s705
        %v707 = vmul.f32 %v698, %v706
        %v708 = vmul.f32 %v699, %v706
        %711 = vrot.lane.b32.xlu0 %v707, 127
        %v712 = vpop.permute.xlu0 %711
        %713 = vrot.lane.b32.xlu0 %v708, 127
        %v714 = vpop.permute.xlu0 %713
        %v717 = vadd.f32 %v703, %v712
        %v718 = vadd.f32 %v704, %v714
        %s719 = sld [smem:[#allocation8 + $0x1a]]
        %v720 = vstv %s719
        %v721 = vmul.f32 %v698, %v720
        %v722 = vmul.f32 %v699, %v720
        %725 = vrot.lane.b32.xlu0 %v721, 126
        %v726 = vpop.permute.xlu0 %725
        %727 = vrot.lane.b32.xlu0 %v722, 126
        %v728 = vpop.permute.xlu0 %727
        %v731 = vadd.f32 %v717, %v726
        %v732 = vadd.f32 %v718, %v728
        %s733 = sld [smem:[#allocation8 + $0x1b]]
        %s734 = scalar_lea.vmem [#allocation2], 72
        %v735 = vld [vmem:[%s734] sm:$0xff]
        %v736 = vld [vmem:[%s734 + $0x8] sm:$0xff]
        %v737 = vstv %s733
        %v738 = vmul.f32 %v735, %v737
        %v739 = vmul.f32 %v736, %v737
        %s740 = sld [smem:[#allocation8 + $0x1c]]
        %v741 = vstv %s740
        %v742 = vmul.f32 %v735, %v741
        %v743 = vmul.f32 %v736, %v741
        %746 = vrot.lane.b32.xlu0 %v742, 127
        %v747 = vpop.permute.xlu0 %746
        %748 = vrot.lane.b32.xlu0 %v743, 127
        %v749 = vpop.permute.xlu0 %748
        %v752 = vadd.f32 %v738, %v747
        %v753 = vadd.f32 %v739, %v749
        %s754 = sld [smem:[#allocation8 + $0x1d]]
        %v755 = vstv %s754
        %v756 = vmul.f32 %v735, %v755
        %v757 = vmul.f32 %v736, %v755
        %760 = vrot.lane.b32.xlu0 %v756, 126
        %v761 = vpop.permute.xlu0 %760
        %762 = vrot.lane.b32.xlu0 %v757, 126
        %v763 = vpop.permute.xlu0 %762
        %v766 = vadd.f32 %v752, %v761
        %v767 = vadd.f32 %v753, %v763
        %s768 = sld [smem:[#allocation8 + $0x1e]]
        %v769 = vld [vmem:[%s734 + $0x1] sm:$0xff]
        %v770 = vld [vmem:[%s734 + $0x9] sm:$0xff]
        %v771 = vstv %s768
        %v772 = vmul.f32 %v769, %v771
        %v773 = vmul.f32 %v770, %v771
        %v774 = vadd.f32 %v766, %v772
        %v775 = vadd.f32 %v767, %v773
        %s776 = sld [smem:[#allocation8 + $0x1f]]
        %v777 = vstv %s776
        %v778 = vmul.f32 %v769, %v777
        %v779 = vmul.f32 %v770, %v777
        %782 = vrot.lane.b32.xlu0 %v778, 127
        %v783 = vpop.permute.xlu0 %782
        %784 = vrot.lane.b32.xlu0 %v779, 127
        %v785 = vpop.permute.xlu0 %784
        %v788 = vadd.f32 %v774, %v783
        %v789 = vadd.f32 %v775, %v785
        %s790 = sld [smem:[#allocation8 + $0x20]]
        %v791 = vstv %s790
        %v792 = vmul.f32 %v769, %v791
        %v793 = vmul.f32 %v770, %v791
        %796 = vrot.lane.b32.xlu0 %v792, 126
        %v797 = vpop.permute.xlu0 %796
        %798 = vrot.lane.b32.xlu0 %v793, 126
        %v799 = vpop.permute.xlu0 %798
        %v802 = vadd.f32 %v788, %v797
        %v803 = vadd.f32 %v789, %v799
        %s804 = sld [smem:[#allocation8 + $0x21]]
        %v805 = vld [vmem:[%s734 + $0x2] sm:$0xff]
        %v806 = vld [vmem:[%s734 + $0xa] sm:$0xff]
        %v807 = vstv %s804
        %v808 = vmul.f32 %v805, %v807
        %v809 = vmul.f32 %v806, %v807
        %v810 = vadd.f32 %v802, %v808
        %v811 = vadd.f32 %v803, %v809
        %s812 = sld [smem:[#allocation8 + $0x22]]
        %v813 = vstv %s812
        %v814 = vmul.f32 %v805, %v813
        %v815 = vmul.f32 %v806, %v813
        %818 = vrot.lane.b32.xlu0 %v814, 127
        %v819 = vpop.permute.xlu0 %818
        %820 = vrot.lane.b32.xlu0 %v815, 127
        %v821 = vpop.permute.xlu0 %820
        %v824 = vadd.f32 %v810, %v819
        %v825 = vadd.f32 %v811, %v821
        %s826 = sld [smem:[#allocation8 + $0x23]]
        %v827 = vstv %s826
        %v828 = vmul.f32 %v805, %v827
        %v829 = vmul.f32 %v806, %v827
        %832 = vrot.lane.b32.xlu0 %v828, 126
        %v833 = vpop.permute.xlu0 %832
        %834 = vrot.lane.b32.xlu0 %v829, 126
        %v835 = vpop.permute.xlu0 %834
        %v838 = vadd.f32 %v824, %v833
        %v839 = vadd.f32 %v825, %v835
        %s840 = sld [smem:[#allocation9]]
        %v841 = vstv %s840
        %v842 = vmul.f32 %v517, %v841
        %v843 = vmul.f32 %v518, %v841
        %s844 = sld [smem:[#allocation9 + $0x1]]
        %v845 = vstv %s844
        %v846 = vmul.f32 %v624, %v845
        %v847 = vmul.f32 %v625, %v845
        %v848 = vadd.f32 %v842, %v846
        %v849 = vadd.f32 %v843, %v847
        %s850 = sld [smem:[#allocation9 + $0x2]]
        %v851 = vstv %s850
        %v852 = vmul.f32 %v731, %v851
        %v853 = vmul.f32 %v732, %v851
        %v854 = vadd.f32 %v848, %v852
        %v855 = vadd.f32 %v849, %v853
        %s856 = sld [smem:[#allocation9 + $0x3]]
        %v857 = vstv %s856
        %v858 = vmul.f32 %v838, %v857
        %v859 = vmul.f32 %v839, %v857
        %v860 = vadd.f32 %v854, %v858
        %v861 = vadd.f32 %v855, %v859
        %v862 = vmax.f32 %v860, 0.0
        %v863 = vmax.f32 %v861, 0.0
        %866 = vrot.lane.b32.xlu0 %v862, 1
        %v867 = vpop.permute.xlu0 %866
        %868 = vrot.lane.b32.xlu0 %v863, 1
        %v869 = vpop.permute.xlu0 %868
        %872 = vst.msk [vmem:[#allocation3 + $0x1] sm:$0xff] %vm404, %v867
        %873 = vst.msk [vmem:[#allocation3 + $0x9] sm:$0xff] %vm404, %v869
        %s874 = sld [smem:[#allocation9 + $0x4]]
        %v875 = vstv %s874
        %v876 = vmul.f32 %v517, %v875
        %v877 = vmul.f32 %v518, %v875
        %s878 = sld [smem:[#allocation9 + $0x5]]
        %v879 = vstv %s878
        %v880 = vmul.f32 %v624, %v879
        %v881 = vmul.f32 %v625, %v879
        %v882 = vadd.f32 %v876, %v880
        %v883 = vadd.f32 %v877, %v881
        %s884 = sld [smem:[#allocation9 + $0x6]]
        %v885 = vstv %s884
        %v886 = vmul.f32 %v731, %v885
        %v887 = vmul.f32 %v732, %v885
        %v888 = vadd.f32 %v882, %v886
        %v889 = vadd.f32 %v883, %v887
        %s890 = sld [smem:[#allocation9 + $0x7]]
        %v891 = vstv %s890
        %v892 = vmul.f32 %v838, %v891
        %v893 = vmul.f32 %v839, %v891
        %v894 = vadd.f32 %v888, %v892
        %v895 = vadd.f32 %v889, %v893
        %v896 = vmax.f32 %v894, 0.0
        %v897 = vmax.f32 %v895, 0.0
        %900 = vrot.lane.b32.xlu0 %v896, 1
        %v901 = vpop.permute.xlu0 %900
        %902 = vrot.lane.b32.xlu0 %v897, 1
        %v903 = vpop.permute.xlu0 %902
        %s906 = scalar_lea.vmem [#allocation3], 24
        %907 = vst.msk [vmem:[%s906 + $0x1] sm:$0xff] %vm404, %v901
        %908 = vst.msk [vmem:[%s906 + $0x9] sm:$0xff] %vm404, %v903
        %s909 = sld [smem:[#allocation9 + $0x8]]
        %v910 = vstv %s909
        %v911 = vmul.f32 %v517, %v910
        %v912 = vmul.f32 %v518, %v910
        %s913 = sld [smem:[#allocation9 + $0x9]]
        %v914 = vstv %s913
        %v915 = vmul.f32 %v624, %v914
        %v916 = vmul.f32 %v625, %v914
        %v917 = vadd.f32 %v911, %v915
        %v918 = vadd.f32 %v912, %v916
        %s919 = sld [smem:[#allocation9 + $0xa]]
        %v920 = vstv %s919
        %v921 = vmul.f32 %v731, %v920
        %v922 = vmul.f32 %v732, %v920
        %v923 = vadd.f32 %v917, %v921
        %v924 = vadd.f32 %v918, %v922
        %s925 = sld [smem:[#allocation9 + $0xb]]
        %v926 = vstv %s925
        %v927 = vmul.f32 %v838, %v926
        %v928 = vmul.f32 %v839, %v926
        %v929 = vadd.f32 %v923, %v927
        %v930 = vadd.f32 %v924, %v928
        %v931 = vmax.f32 %v929, 0.0
        %v932 = vmax.f32 %v930, 0.0
        %935 = vrot.lane.b32.xlu0 %v931, 1
        %v936 = vpop.permute.xlu0 %935
        %937 = vrot.lane.b32.xlu0 %v932, 1
        %v938 = vpop.permute.xlu0 %937
        %s941 = scalar_lea.vmem [#allocation3], 48
        %942 = vst.msk [vmem:[%s941 + $0x1] sm:$0xff] %vm404, %v936
        %943 = vst.msk [vmem:[%s941 + $0x9] sm:$0xff] %vm404, %v938
        %s944 = sld [smem:[#allocation9 + $0xc]]
        %v945 = vstv %s944
        %v946 = vmul.f32 %v517, %v945
        %v947 = vmul.f32 %v518, %v945
        %s948 = sld [smem:[#allocation9 + $0xd]]
        %v949 = vstv %s948
        %v950 = vmul.f32 %v624, %v949
        %v951 = vmul.f32 %v625, %v949
        %v952 = vadd.f32 %v946, %v950
        %v953 = vadd.f32 %v947, %v951
        %s954 = sld [smem:[#allocation9 + $0xe]]
        %v955 = vstv %s954
        %v956 = vmul.f32 %v731, %v955
        %v957 = vmul.f32 %v732, %v955
        %v958 = vadd.f32 %v952, %v956
        %v959 = vadd.f32 %v953, %v957
        %s960 = sld [smem:[#allocation9 + $0xf]]
        %v961 = vstv %s960
        %v962 = vmul.f32 %v838, %v961
        %v963 = vmul.f32 %v839, %v961
        %v964 = vadd.f32 %v958, %v962
        %v965 = vadd.f32 %v959, %v963
        %v966 = vmax.f32 %v964, 0.0
        %v967 = vmax.f32 %v965, 0.0
        %970 = vrot.lane.b32.xlu0 %v966, 1
        %v971 = vpop.permute.xlu0 %970
        %972 = vrot.lane.b32.xlu0 %v967, 1
        %v973 = vpop.permute.xlu0 %972
        %s976 = scalar_lea.vmem [#allocation3], 72
        %977 = vst.msk [vmem:[%s976 + $0x1] sm:$0xff] %vm404, %v971
        %978 = vst.msk [vmem:[%s976 + $0x9] sm:$0xff] %vm404, %v973
        %s979 = sld [smem:[#allocation11]]
        %v980 = vld [vmem:[#allocation3] sm:$0xff]
        %v981 = vld [vmem:[#allocation3 + $0x8] sm:$0xff]
        %v982 = vstv %s979
        %v983 = vmul.f32 %v980, %v982
        %v984 = vmul.f32 %v981, %v982
        %s985 = sld [smem:[#allocation11 + $0x1]]
        %v986 = vstv %s985
        %v987 = vmul.f32 %v980, %v986
        %v988 = vmul.f32 %v981, %v986
        %991 = vrot.lane.b32.xlu0 %v987, 127
        %v992 = vpop.permute.xlu0 %991
        %993 = vrot.lane.b32.xlu0 %v988, 127
        %v994 = vpop.permute.xlu0 %993
        %v997 = vadd.f32 %v983, %v992
        %v998 = vadd.f32 %v984, %v994
        %s999 = sld [smem:[#allocation11 + $0x2]]
        %v1000 = vstv %s999
        %v1001 = vmul.f32 %v980, %v1000
        %v1002 = vmul.f32 %v981, %v1000
        %1005 = vrot.lane.b32.xlu0 %v1001, 126
        %v1006 = vpop.permute.xlu0 %1005
        %1007 = vrot.lane.b32.xlu0 %v1002, 126
        %v1008 = vpop.permute.xlu0 %1007
        %v1011 = vadd.f32 %v997, %v1006
        %v1012 = vadd.f32 %v998, %v1008
        %s1013 = sld [smem:[#allocation11 + $0x3]]
        %v1014 = vld [vmem:[#allocation3 + $0x1] sm:$0xff]
        %v1015 = vld [vmem:[#allocation3 + $0x9] sm:$0xff]
        %v1016 = vstv %s1013
        %v1017 = vmul.f32 %v1014, %v1016
        %v1018 = vmul.f32 %v1015, %v1016
        %v1019 = vadd.f32 %v1011, %v1017
        %v1020 = vadd.f32 %v1012, %v1018
        %s1021 = sld [smem:[#allocation11 + $0x4]]
        %v1022 = vstv %s1021
        %v1023 = vmul.f32 %v1014, %v1022
        %v1024 = vmul.f32 %v1015, %v1022
        %1027 = vrot.lane.b32.xlu0 %v1023, 127
        %v1028 = vpop.permute.xlu0 %1027
        %1029 = vrot.lane.b32.xlu0 %v1024, 127
        %v1030 = vpop.permute.xlu0 %1029
        %v1033 = vadd.f32 %v1019, %v1028
        %v1034 = vadd.f32 %v1020, %v1030
        %s1035 = sld [smem:[#allocation11 + $0x5]]
        %v1036 = vstv %s1035
        %v1037 = vmul.f32 %v1014, %v1036
        %v1038 = vmul.f32 %v1015, %v1036
        %1041 = vrot.lane.b32.xlu0 %v1037, 126
        %v1042 = vpop.permute.xlu0 %1041
        %1043 = vrot.lane.b32.xlu0 %v1038, 126
        %v1044 = vpop.permute.xlu0 %1043
        %v1047 = vadd.f32 %v1033, %v1042
        %v1048 = vadd.f32 %v1034, %v1044
        %s1049 = sld [smem:[#allocation11 + $0x6]]
        %v1050 = vld [vmem:[#allocation3 + $0x2] sm:$0xff]
        %v1051 = vld [vmem:[#allocation3 + $0xa] sm:$0xff]
        %v1052 = vstv %s1049
        %v1053 = vmul.f32 %v1050, %v1052
        %v1054 = vmul.f32 %v1051, %v1052
        %v1055 = vadd.f32 %v1047, %v1053
        %v1056 = vadd.f32 %v1048, %v1054
        %s1057 = sld [smem:[#allocation11 + $0x7]]
        %v1058 = vstv %s1057
        %v1059 = vmul.f32 %v1050, %v1058
        %v1060 = vmul.f32 %v1051, %v1058
        %1063 = vrot.lane.b32.xlu0 %v1059, 127
        %v1064 = vpop.permute.xlu0 %1063
        %1065 = vrot.lane.b32.xlu0 %v1060, 127
        %v1066 = vpop.permute.xlu0 %1065
        %v1069 = vadd.f32 %v1055, %v1064
        %v1070 = vadd.f32 %v1056, %v1066
        %s1071 = sld [smem:[#allocation11 + $0x8]]
        %v1072 = vstv %s1071
        %v1073 = vmul.f32 %v1050, %v1072
        %v1074 = vmul.f32 %v1051, %v1072
        %1077 = vrot.lane.b32.xlu0 %v1073, 126
        %v1078 = vpop.permute.xlu0 %1077
        %1079 = vrot.lane.b32.xlu0 %v1074, 126
        %v1080 = vpop.permute.xlu0 %1079
        %v1083 = vadd.f32 %v1069, %v1078
        %v1084 = vadd.f32 %v1070, %v1080
        %s1085 = sld [smem:[#allocation11 + $0x9]]
        %v1086 = vld [vmem:[%s906] sm:$0xff]
        %v1087 = vld [vmem:[%s906 + $0x8] sm:$0xff]
        %v1088 = vstv %s1085
        %v1089 = vmul.f32 %v1086, %v1088
        %v1090 = vmul.f32 %v1087, %v1088
        %s1091 = sld [smem:[#allocation11 + $0xa]]
        %v1092 = vstv %s1091
        %v1093 = vmul.f32 %v1086, %v1092
        %v1094 = vmul.f32 %v1087, %v1092
        %1097 = vrot.lane.b32.xlu0 %v1093, 127
        %v1098 = vpop.permute.xlu0 %1097
        %1099 = vrot.lane.b32.xlu0 %v1094, 127
        %v1100 = vpop.permute.xlu0 %1099
        %v1103 = vadd.f32 %v1089, %v1098
        %v1104 = vadd.f32 %v1090, %v1100
        %s1105 = sld [smem:[#allocation11 + $0xb]]
        %v1106 = vstv %s1105
        %v1107 = vmul.f32 %v1086, %v1106
        %v1108 = vmul.f32 %v1087, %v1106
        %1111 = vrot.lane.b32.xlu0 %v1107, 126
        %v1112 = vpop.permute.xlu0 %1111
        %1113 = vrot.lane.b32.xlu0 %v1108, 126
        %v1114 = vpop.permute.xlu0 %1113
        %v1117 = vadd.f32 %v1103, %v1112
        %v1118 = vadd.f32 %v1104, %v1114
        %s1119 = sld [smem:[#allocation11 + $0xc]]
        %v1120 = vld [vmem:[%s906 + $0x1] sm:$0xff]
        %v1121 = vld [vmem:[%s906 + $0x9] sm:$0xff]
        %v1122 = vstv %s1119
        %v1123 = vmul.f32 %v1120, %v1122
        %v1124 = vmul.f32 %v1121, %v1122
        %v1125 = vadd.f32 %v1117, %v1123
        %v1126 = vadd.f32 %v1118, %v1124
        %s1127 = sld [smem:[#allocation11 + $0xd]]
        %v1128 = vstv %s1127
        %v1129 = vmul.f32 %v1120, %v1128
        %v1130 = vmul.f32 %v1121, %v1128
        %1133 = vrot.lane.b32.xlu0 %v1129, 127
        %v1134 = vpop.permute.xlu0 %1133
        %1135 = vrot.lane.b32.xlu0 %v1130, 127
        %v1136 = vpop.permute.xlu0 %1135
        %v1139 = vadd.f32 %v1125, %v1134
        %v1140 = vadd.f32 %v1126, %v1136
        %s1141 = sld [smem:[#allocation11 + $0xe]]
        %v1142 = vstv %s1141
        %v1143 = vmul.f32 %v1120, %v1142
        %v1144 = vmul.f32 %v1121, %v1142
        %1147 = vrot.lane.b32.xlu0 %v1143, 126
        %v1148 = vpop.permute.xlu0 %1147
        %1149 = vrot.lane.b32.xlu0 %v1144, 126
        %v1150 = vpop.permute.xlu0 %1149
        %v1153 = vadd.f32 %v1139, %v1148
        %v1154 = vadd.f32 %v1140, %v1150
        %s1155 = sld [smem:[#allocation11 + $0xf]]
        %v1156 = vld [vmem:[%s906 + $0x2] sm:$0xff]
        %v1157 = vld [vmem:[%s906 + $0xa] sm:$0xff]
        %v1158 = vstv %s1155
        %v1159 = vmul.f32 %v1156, %v1158
        %v1160 = vmul.f32 %v1157, %v1158
        %v1161 = vadd.f32 %v1153, %v1159
        %v1162 = vadd.f32 %v1154, %v1160
        %s1163 = sld [smem:[#allocation11 + $0x10]]
        %v1164 = vstv %s1163
        %v1165 = vmul.f32 %v1156, %v1164
        %v1166 = vmul.f32 %v1157, %v1164
        %1169 = vrot.lane.b32.xlu0 %v1165, 127
        %v1170 = vpop.permute.xlu0 %1169
        %1171 = vrot.lane.b32.xlu0 %v1166, 127
        %v1172 = vpop.permute.xlu0 %1171
        %v1175 = vadd.f32 %v1161, %v1170
        %v1176 = vadd.f32 %v1162, %v1172
        %s1177 = sld [smem:[#allocation11 + $0x11]]
        %v1178 = vstv %s1177
        %v1179 = vmul.f32 %v1156, %v1178
        %v1180 = vmul.f32 %v1157, %v1178
        %1183 = vrot.lane.b32.xlu0 %v1179, 126
        %v1184 = vpop.permute.xlu0 %1183
        %1185 = vrot.lane.b32.xlu0 %v1180, 126
        %v1186 = vpop.permute.xlu0 %1185
        %v1189 = vadd.f32 %v1175, %v1184
        %v1190 = vadd.f32 %v1176, %v1186
        %s1191 = sld [smem:[#allocation11 + $0x12]]
        %v1192 = vld [vmem:[%s941] sm:$0xff]
        %v1193 = vld [vmem:[%s941 + $0x8] sm:$0xff]
        %v1194 = vstv %s1191
        %v1195 = vmul.f32 %v1192, %v1194
        %v1196 = vmul.f32 %v1193, %v1194
        %s1197 = sld [smem:[#allocation11 + $0x13]]
        %v1198 = vstv %s1197
        %v1199 = vmul.f32 %v1192, %v1198
        %v1200 = vmul.f32 %v1193, %v1198
        %1203 = vrot.lane.b32.xlu0 %v1199, 127
        %v1204 = vpop.permute.xlu0 %1203
        %1205 = vrot.lane.b32.xlu0 %v1200, 127
        %v1206 = vpop.permute.xlu0 %1205
        %v1209 = vadd.f32 %v1195, %v1204
        %v1210 = vadd.f32 %v1196, %v1206
        %s1211 = sld [smem:[#allocation11 + $0x14]]
        %v1212 = vstv %s1211
        %v1213 = vmul.f32 %v1192, %v1212
        %v1214 = vmul.f32 %v1193, %v1212
        %1217 = vrot.lane.b32.xlu0 %v1213, 126
        %v1218 = vpop.permute.xlu0 %1217
        %1219 = vrot.lane.b32.xlu0 %v1214, 126
        %v1220 = vpop.permute.xlu0 %1219
        %v1223 = vadd.f32 %v1209, %v1218
        %v1224 = vadd.f32 %v1210, %v1220
        %s1225 = sld [smem:[#allocation11 + $0x15]]
        %v1226 = vld [vmem:[%s941 + $0x1] sm:$0xff]
        %v1227 = vld [vmem:[%s941 + $0x9] sm:$0xff]
        %v1228 = vstv %s1225
        %v1229 = vmul.f32 %v1226, %v1228
        %v1230 = vmul.f32 %v1227, %v1228
        %v1231 = vadd.f32 %v1223, %v1229
        %v1232 = vadd.f32 %v1224, %v1230
        %s1233 = sld [smem:[#allocation11 + $0x16]]
        %v1234 = vstv %s1233
        %v1235 = vmul.f32 %v1226, %v1234
        %v1236 = vmul.f32 %v1227, %v1234
        %1239 = vrot.lane.b32.xlu0 %v1235, 127
        %v1240 = vpop.permute.xlu0 %1239
        %1241 = vrot.lane.b32.xlu0 %v1236, 127
        %v1242 = vpop.permute.xlu0 %1241
        %v1245 = vadd.f32 %v1231, %v1240
        %v1246 = vadd.f32 %v1232, %v1242
        %s1247 = sld [smem:[#allocation11 + $0x17]]
        %v1248 = vstv %s1247
        %v1249 = vmul.f32 %v1226, %v1248
        %v1250 = vmul.f32 %v1227, %v1248
        %1253 = vrot.lane.b32.xlu0 %v1249, 126
        %v1254 = vpop.permute.xlu0 %1253
        %1255 = vrot.lane.b32.xlu0 %v1250, 126
        %v1256 = vpop.permute.xlu0 %1255
        %v1259 = vadd.f32 %v1245, %v1254
        %v1260 = vadd.f32 %v1246, %v1256
        %s1261 = sld [smem:[#allocation11 + $0x18]]
        %v1262 = vld [vmem:[%s941 + $0x2] sm:$0xff]
        %v1263 = vld [vmem:[%s941 + $0xa] sm:$0xff]
        %v1264 = vstv %s1261
        %v1265 = vmul.f32 %v1262, %v1264
        %v1266 = vmul.f32 %v1263, %v1264
        %v1267 = vadd.f32 %v1259, %v1265
        %v1268 = vadd.f32 %v1260, %v1266
        %s1269 = sld [smem:[#allocation11 + $0x19]]
        %v1270 = vstv %s1269
        %v1271 = vmul.f32 %v1262, %v1270
        %v1272 = vmul.f32 %v1263, %v1270
        %1275 = vrot.lane.b32.xlu0 %v1271, 127
        %v1276 = vpop.permute.xlu0 %1275
        %1277 = vrot.lane.b32.xlu0 %v1272, 127
        %v1278 = vpop.permute.xlu0 %1277
        %v1281 = vadd.f32 %v1267, %v1276
        %v1282 = vadd.f32 %v1268, %v1278
        %s1283 = sld [smem:[#allocation11 + $0x1a]]
        %v1284 = vstv %s1283
        %v1285 = vmul.f32 %v1262, %v1284
        %v1286 = vmul.f32 %v1263, %v1284
        %1289 = vrot.lane.b32.xlu0 %v1285, 126
        %v1290 = vpop.permute.xlu0 %1289
        %1291 = vrot.lane.b32.xlu0 %v1286, 126
        %v1292 = vpop.permute.xlu0 %1291
        %v1295 = vadd.f32 %v1281, %v1290
        %v1296 = vadd.f32 %v1282, %v1292
        %s1297 = sld [smem:[#allocation11 + $0x1b]]
        %v1298 = vld [vmem:[%s976] sm:$0xff]
        %v1299 = vld [vmem:[%s976 + $0x8] sm:$0xff]
        %v1300 = vstv %s1297
        %v1301 = vmul.f32 %v1298, %v1300
        %v1302 = vmul.f32 %v1299, %v1300
        %s1303 = sld [smem:[#allocation11 + $0x1c]]
        %v1304 = vstv %s1303
        %v1305 = vmul.f32 %v1298, %v1304
        %v1306 = vmul.f32 %v1299, %v1304
        %1309 = vrot.lane.b32.xlu0 %v1305, 127
        %v1310 = vpop.permute.xlu0 %1309
        %1311 = vrot.lane.b32.xlu0 %v1306, 127
        %v1312 = vpop.permute.xlu0 %1311
        %v1315 = vadd.f32 %v1301, %v1310
        %v1316 = vadd.f32 %v1302, %v1312
        %s1317 = sld [smem:[#allocation11 + $0x1d]]
        %v1318 = vstv %s1317
        %v1319 = vmul.f32 %v1298, %v1318
        %v1320 = vmul.f32 %v1299, %v1318
        %1323 = vrot.lane.b32.xlu0 %v1319, 126
        %v1324 = vpop.permute.xlu0 %1323
        %1325 = vrot.lane.b32.xlu0 %v1320, 126
        %v1326 = vpop.permute.xlu0 %1325
        %v1329 = vadd.f32 %v1315, %v1324
        %v1330 = vadd.f32 %v1316, %v1326
        %s1331 = sld [smem:[#allocation11 + $0x1e]]
        %v1332 = vld [vmem:[%s976 + $0x1] sm:$0xff]
        %v1333 = vld [vmem:[%s976 + $0x9] sm:$0xff]
        %v1334 = vstv %s1331
        %v1335 = vmul.f32 %v1332, %v1334
        %v1336 = vmul.f32 %v1333, %v1334
        %v1337 = vadd.f32 %v1329, %v1335
        %v1338 = vadd.f32 %v1330, %v1336
        %s1339 = sld [smem:[#allocation11 + $0x1f]]
        %v1340 = vstv %s1339
        %v1341 = vmul.f32 %v1332, %v1340
        %v1342 = vmul.f32 %v1333, %v1340
        %1345 = vrot.lane.b32.xlu0 %v1341, 127
        %v1346 = vpop.permute.xlu0 %1345
        %1347 = vrot.lane.b32.xlu0 %v1342, 127
        %v1348 = vpop.permute.xlu0 %1347
        %v1351 = vadd.f32 %v1337, %v1346
        %v1352 = vadd.f32 %v1338, %v1348
        %s1353 = sld [smem:[#allocation11 + $0x20]]
        %v1354 = vstv %s1353
        %v1355 = vmul.f32 %v1332, %v1354
        %v1356 = vmul.f32 %v1333, %v1354
        %1359 = vrot.lane.b32.xlu0 %v1355, 126
        %v1360 = vpop.permute.xlu0 %1359
        %1361 = vrot.lane.b32.xlu0 %v1356, 126
        %v1362 = vpop.permute.xlu0 %1361
        %v1365 = vadd.f32 %v1351, %v1360
        %v1366 = vadd.f32 %v1352, %v1362
        %s1367 = sld [smem:[#allocation11 + $0x21]]
        %v1368 = vld [vmem:[%s976 + $0x2] sm:$0xff]
        %v1369 = vld [vmem:[%s976 + $0xa] sm:$0xff]
        %v1370 = vstv %s1367
        %v1371 = vmul.f32 %v1368, %v1370
        %v1372 = vmul.f32 %v1369, %v1370
        %v1373 = vadd.f32 %v1365, %v1371
        %v1374 = vadd.f32 %v1366, %v1372
        %s1375 = sld [smem:[#allocation11 + $0x22]]
        %v1376 = vstv %s1375
        %v1377 = vmul.f32 %v1368, %v1376
        %v1378 = vmul.f32 %v1369, %v1376
        %1381 = vrot.lane.b32.xlu0 %v1377, 127
        %v1382 = vpop.permute.xlu0 %1381
        %1383 = vrot.lane.b32.xlu0 %v1378, 127
        %v1384 = vpop.permute.xlu0 %1383
        %v1387 = vadd.f32 %v1373, %v1382
        %v1388 = vadd.f32 %v1374, %v1384
        %s1389 = sld [smem:[#allocation11 + $0x23]]
        %v1390 = vstv %s1389
        %v1391 = vmul.f32 %v1368, %v1390
        %v1392 = vmul.f32 %v1369, %v1390
        %1395 = vrot.lane.b32.xlu0 %v1391, 126
        %v1396 = vpop.permute.xlu0 %1395
        %1397 = vrot.lane.b32.xlu0 %v1392, 126
        %v1398 = vpop.permute.xlu0 %1397
        %v1401 = vadd.f32 %v1387, %v1396
        %v1402 = vadd.f32 %v1388, %v1398
        %s1403 = sld [smem:[#allocation12]]
        %v1404 = vstv %s1403
        %v1405 = vmul.f32 %v1083, %v1404
        %v1406 = vmul.f32 %v1084, %v1404
        %s1407 = sld [smem:[#allocation12 + $0x1]]
        %v1408 = vstv %s1407
        %v1409 = vmul.f32 %v1189, %v1408
        %v1410 = vmul.f32 %v1190, %v1408
        %v1411 = vadd.f32 %v1405, %v1409
        %v1412 = vadd.f32 %v1406, %v1410
        %s1413 = sld [smem:[#allocation12 + $0x2]]
        %v1414 = vstv %s1413
        %v1415 = vmul.f32 %v1295, %v1414
        %v1416 = vmul.f32 %v1296, %v1414
        %v1417 = vadd.f32 %v1411, %v1415
        %v1418 = vadd.f32 %v1412, %v1416
        %s1419 = sld [smem:[#allocation12 + $0x3]]
        %v1420 = vstv %s1419
        %v1421 = vmul.f32 %v1401, %v1420
        %v1422 = vmul.f32 %v1402, %v1420
        %v1423 = vadd.f32 %v1417, %v1421
        %v1424 = vadd.f32 %v1418, %v1422
        %vm1425 = vcmask 130048
        %1426 = vst.msk [vmem:[%s294] sm:$0xff] %vm1425, %v1423
        %1427 = vst.msk [vmem:[%s294 + $0x8] sm:$0xff] %vm1425, %v1424
        %s1428 = sld [smem:[#allocation12 + $0x4]]
        %v1429 = vstv %s1428
        %v1430 = vmul.f32 %v1083, %v1429
        %v1431 = vmul.f32 %v1084, %v1429
        %s1432 = sld [smem:[#allocation12 + $0x5]]
        %v1433 = vstv %s1432
        %v1434 = vmul.f32 %v1189, %v1433
        %v1435 = vmul.f32 %v1190, %v1433
        %v1436 = vadd.f32 %v1430, %v1434
        %v1437 = vadd.f32 %v1431, %v1435
        %s1438 = sld [smem:[#allocation12 + $0x6]]
        %v1439 = vstv %s1438
        %v1440 = vmul.f32 %v1295, %v1439
        %v1441 = vmul.f32 %v1296, %v1439
        %v1442 = vadd.f32 %v1436, %v1440
        %v1443 = vadd.f32 %v1437, %v1441
        %s1444 = sld [smem:[#allocation12 + $0x7]]
        %v1445 = vstv %s1444
        %v1446 = vmul.f32 %v1401, %v1445
        %v1447 = vmul.f32 %v1402, %v1445
        %v1448 = vadd.f32 %v1442, %v1446
        %v1449 = vadd.f32 %v1443, %v1447
        %s1450 = scalar_lea.vmem %s294, 16 [#allocation14]
        %1451 = vst.msk [vmem:[%s1450] sm:$0xff] %vm1425, %v1448
        %1452 = vst.msk [vmem:[%s1450 + $0x8] sm:$0xff] %vm1425, %v1449
        %s1453 = sld [smem:[#allocation12 + $0x8]]
        %v1454 = vstv %s1453
        %v1455 = vmul.f32 %v1083, %v1454
        %v1456 = vmul.f32 %v1084, %v1454
        %s1457 = sld [smem:[#allocation12 + $0x9]]
        %v1458 = vstv %s1457
        %v1459 = vmul.f32 %v1189, %v1458
        %v1460 = vmul.f32 %v1190, %v1458
        %v1461 = vadd.f32 %v1455, %v1459
        %v1462 = vadd.f32 %v1456, %v1460
        %s1463 = sld [smem:[#allocation12 + $0xa]]
        %v1464 = vstv %s1463
        %v1465 = vmul.f32 %v1295, %v1464
        %v1466 = vmul.f32 %v1296, %v1464
        %v1467 = vadd.f32 %v1461, %v1465
        %v1468 = vadd.f32 %v1462, %v1466
        %s1469 = sld [smem:[#allocation12 + $0xb]]
        %v1470 = vstv %s1469
        %v1471 = vmul.f32 %v1401, %v1470
        %v1472 = vmul.f32 %v1402, %v1470
        %v1473 = vadd.f32 %v1467, %v1471
        %v1474 = vadd.f32 %v1468, %v1472
        %s1475 = scalar_lea.vmem %s294, 32 [#allocation14]
        %1476 = vst.msk [vmem:[%s1475] sm:$0xff] %vm1425, %v1473
        %1477 = vst.msk [vmem:[%s1475 + $0x8] sm:$0xff] %vm1425, %v1474
        %s1478 = sld [smem:[#allocation12 + $0xc]]
        %v1479 = vstv %s1478
        %v1480 = vmul.f32 %v1083, %v1479
        %v1481 = vmul.f32 %v1084, %v1479
        %s1482 = sld [smem:[#allocation12 + $0xd]]
        %v1483 = vstv %s1482
        %v1484 = vmul.f32 %v1189, %v1483
        %v1485 = vmul.f32 %v1190, %v1483
        %v1486 = vadd.f32 %v1480, %v1484
        %v1487 = vadd.f32 %v1481, %v1485
        %s1488 = sld [smem:[#allocation12 + $0xe]]
        %v1489 = vstv %s1488
        %v1490 = vmul.f32 %v1295, %v1489
        %v1491 = vmul.f32 %v1296, %v1489
        %v1492 = vadd.f32 %v1486, %v1490
        %v1493 = vadd.f32 %v1487, %v1491
        %s1494 = sld [smem:[#allocation12 + $0xf]]
        %v1495 = vstv %s1494
        %v1496 = vmul.f32 %v1401, %v1495
        %v1497 = vmul.f32 %v1402, %v1495
        %v1498 = vadd.f32 %v1492, %v1496
        %v1499 = vadd.f32 %v1493, %v1497
        %s1500 = scalar_lea.vmem %s294, 48 [#allocation14]
        %1501 = vst.msk [vmem:[%s1500] sm:$0xff] %vm1425, %v1498
        %1502 = vst.msk [vmem:[%s1500 + $0x8] sm:$0xff] %vm1425, %v1499
        %s1503 = sld [smem:[#allocation12 + $0x10]]
        %v1504 = vstv %s1503
        %v1505 = vmul.f32 %v1083, %v1504
        %v1506 = vmul.f32 %v1084, %v1504
        %s1507 = sld [smem:[#allocation12 + $0x11]]
        %v1508 = vstv %s1507
        %v1509 = vmul.f32 %v1189, %v1508
        %v1510 = vmul.f32 %v1190, %v1508
        %v1511 = vadd.f32 %v1505, %v1509
        %v1512 = vadd.f32 %v1506, %v1510
        %s1513 = sld [smem:[#allocation12 + $0x12]]
        %v1514 = vstv %s1513
        %v1515 = vmul.f32 %v1295, %v1514
        %v1516 = vmul.f32 %v1296, %v1514
        %v1517 = vadd.f32 %v1511, %v1515
        %v1518 = vadd.f32 %v1512, %v1516
        %s1519 = sld [smem:[#allocation12 + $0x13]]
        %v1520 = vstv %s1519
        %v1521 = vmul.f32 %v1401, %v1520
        %v1522 = vmul.f32 %v1402, %v1520
        %v1523 = vadd.f32 %v1517, %v1521
        %v1524 = vadd.f32 %v1518, %v1522
        %s1525 = scalar_lea.vmem %s294, 64 [#allocation14]
        %1526 = vst.msk [vmem:[%s1525] sm:$0xff] %vm1425, %v1523
        %1527 = vst.msk [vmem:[%s1525 + $0x8] sm:$0xff] %vm1425, %v1524
        %s1528 = sld [smem:[#allocation12 + $0x14]]
        %v1529 = vstv %s1528
        %v1530 = vmul.f32 %v1083, %v1529
        %v1531 = vmul.f32 %v1084, %v1529
        %s1532 = sld [smem:[#allocation12 + $0x15]]
        %v1533 = vstv %s1532
        %v1534 = vmul.f32 %v1189, %v1533
        %v1535 = vmul.f32 %v1190, %v1533
        %v1536 = vadd.f32 %v1530, %v1534
        %v1537 = vadd.f32 %v1531, %v1535
        %s1538 = sld [smem:[#allocation12 + $0x16]]
        %v1539 = vstv %s1538
        %v1540 = vmul.f32 %v1295, %v1539
        %v1541 = vmul.f32 %v1296, %v1539
        %v1542 = vadd.f32 %v1536, %v1540
        %v1543 = vadd.f32 %v1537, %v1541
        %s1544 = sld [smem:[#allocation12 + $0x17]]
        %v1545 = vstv %s1544
        %v1546 = vmul.f32 %v1401, %v1545
        %v1547 = vmul.f32 %v1402, %v1545
        %v1548 = vadd.f32 %v1542, %v1546
        %v1549 = vadd.f32 %v1543, %v1547
        %s1550 = scalar_lea.vmem %s294, 80 [#allocation14]
        %1551 = vst.msk [vmem:[%s1550] sm:$0xff] %vm1425, %v1548
        %1552 = vst.msk [vmem:[%s1550 + $0x8] sm:$0xff] %vm1425, %v1549
        %s1553 = sld [smem:[#allocation12 + $0x18]]
        %v1554 = vstv %s1553
        %v1555 = vmul.f32 %v1083, %v1554
        %v1556 = vmul.f32 %v1084, %v1554
        %s1557 = sld [smem:[#allocation12 + $0x19]]
        %v1558 = vstv %s1557
        %v1559 = vmul.f32 %v1189, %v1558
        %v1560 = vmul.f32 %v1190, %v1558
        %v1561 = vadd.f32 %v1555, %v1559
        %v1562 = vadd.f32 %v1556, %v1560
        %s1563 = sld [smem:[#allocation12 + $0x1a]]
        %v1564 = vstv %s1563
        %v1565 = vmul.f32 %v1295, %v1564
        %v1566 = vmul.f32 %v1296, %v1564
        %v1567 = vadd.f32 %v1561, %v1565
        %v1568 = vadd.f32 %v1562, %v1566
        %s1569 = sld [smem:[#allocation12 + $0x1b]]
        %v1570 = vstv %s1569
        %v1571 = vmul.f32 %v1401, %v1570
        %v1572 = vmul.f32 %v1402, %v1570
        %v1573 = vadd.f32 %v1567, %v1571
        %v1574 = vadd.f32 %v1568, %v1572
        %s1575 = scalar_lea.vmem %s294, 96 [#allocation14]
        %1576 = vst.msk [vmem:[%s1575] sm:$0xff] %vm1425, %v1573
        %1577 = vst.msk [vmem:[%s1575 + $0x8] sm:$0xff] %vm1425, %v1574
        %s1578 = sld [smem:[#allocation12 + $0x1c]]
        %v1579 = vstv %s1578
        %v1580 = vmul.f32 %v1083, %v1579
        %v1581 = vmul.f32 %v1084, %v1579
        %s1582 = sld [smem:[#allocation12 + $0x1d]]
        %v1583 = vstv %s1582
        %v1584 = vmul.f32 %v1189, %v1583
        %v1585 = vmul.f32 %v1190, %v1583
        %v1586 = vadd.f32 %v1580, %v1584
        %v1587 = vadd.f32 %v1581, %v1585
        %s1588 = sld [smem:[#allocation12 + $0x1e]]
        %v1589 = vstv %s1588
        %v1590 = vmul.f32 %v1295, %v1589
        %v1591 = vmul.f32 %v1296, %v1589
        %v1592 = vadd.f32 %v1586, %v1590
        %v1593 = vadd.f32 %v1587, %v1591
        %s1594 = sld [smem:[#allocation12 + $0x1f]]
        %v1595 = vstv %s1594
        %v1596 = vmul.f32 %v1401, %v1595
        %v1597 = vmul.f32 %v1402, %v1595
        %v1598 = vadd.f32 %v1592, %v1596
        %v1599 = vadd.f32 %v1593, %v1597
        %s1600 = scalar_lea.vmem %s294, 112 [#allocation14]
        %1601 = vst.msk [vmem:[%s1600] sm:$0xff] %vm1425, %v1598
        %1602 = vst.msk [vmem:[%s1600 + $0x8] sm:$0xff] %vm1425, %v1599
        %s1603 = sand.u32 %s143, 1
        %s1604 = scalar_lea.sflag [#allocation6], %s1603
        %s1605 = sand.u32 %s143, 1
        %s1606 = smul.addr %s1605, 128
        %s1607 = scalar_lea.vmem [#allocation14], %s1606
        // Predicated region
        $region61: #{tpu_custom_call.1} parent=39 // pred_check
          %p1608 = pneg %p153
        $region62: #{tpu_custom_call.1} parent=39 // pred_check_branch
          %1610 = sbr.rel (%p1608) target = $region64
        $region63: #{tpu_custom_call.1} parent=39 // pred_region
          %s1612 = ssub.s32 2048, 2048
          %1613 = vsyncadd %s1604, %s1612
          %s1614 = smul.addr %s25, 16
          %s1615 = smul.addr %s1614, 128
          %s1616 = scalar_lea.hbm %s5, %s1615
          %s1617 = sshll.u32 %s1607, 4
          %s1618 = int_to_ptr.vmem [resolvable:$true] %s1617
          %1623 = dma.vmem_to_hbm [thread:$0]  %s1618, 2048, %s1616, %s1604, 128, 128, 8
        $region64: #{tpu_custom_call.1} parent=39 // pred_fallthru
          _
      $region40: #{tpu_custom_call.1} parent=5 // pred_fallthru
        _
      %p1624 = scmp.le.s32.totalorder 2, %s20
      // Predicated region
      $region65: #{tpu_custom_call.1} parent=5 // pred_check
        %p1625 = pneg %p1624
      $region66: #{tpu_custom_call.1} parent=5 // pred_check_branch
        %1627 = sbr.rel (%p1625) target = $region68
      $region67: #{tpu_custom_call.1} parent=5 // pred_region
        %s1628 = ssub.s32 %s20, 2
        // Predicated region
        $region69: #{tpu_custom_call.1} parent=67 // pred_check
          %p1629 = pneg %p159
        $region70: #{tpu_custom_call.1} parent=67 // pred_check_branch
          %1631 = sbr.rel (%p1629) target = $region72
        $region71: #{tpu_custom_call.1} parent=67 // pred_region
          %s1632 = sand.u32 %s144, 1
          %s1633 = scalar_lea.sflag [#allocation6], %s1632
          %s1634 = sand.u32 %s144, 1
          %s1635 = smul.addr %s1634, 128
          %s1636 = scalar_lea.vmem [#allocation14], %s1635
          %1637 = dma.done %s1633, 2048
        $region72: #{tpu_custom_call.1} parent=67 // pred_fallthru
          _
      $region68: #{tpu_custom_call.1} parent=5 // pred_fallthru
        _
    $region6: #{tpu_custom_call.1} parent=1 // loop_footer
      %s24 = sadd.s32 1, %s20
    $region7: #{tpu_custom_call.1} parent=1 // loop_footer_branch
      %19 = sbr.rel target = $region3
    $region8: #{tpu_custom_call.1} parent=1 // loop_exit
      _
    %1638 = vsyncpa [#allocation5], 1
    %s1639 = scalar_lea.sflag [#allocation5], 1
    %1640 = vsyncpa %s1639, 1
    %1641 = vsyncpa [#allocation6], 1
    %s1642 = scalar_lea.sflag [#allocation6], 1
    %1643 = vsyncpa %s1642, 1
    %1644 = vsyncpa [#allocation7], 1
    %s1645 = scalar_lea.sflag [#allocation7], 1
    %1646 = vsyncpa %s1645, 1
    %1647 = vsyncpa [#allocation10], 1
    %1648 = vsyncpa [#allocation13], 1

</llo_original>
